<compile_context>
chip_gen: v5e
topology: v5e:2x2
jax: 0.10.0
libtpu: 0.0.40
codegen_flags: <defaults>
</compile_context>

<pallas_src>
import functools

import jax
import jax.numpy as jnp
from jax.experimental import pallas as pl
from jax.experimental.pallas import tpu as pltpu


def _tcn_kernel(x_ref, w_ref, shift_ref, o_ref, *, K, V, T_out):
    # x_ref:     (Tp*V, Cp)   zero-padded input rows for one batch element;
    #                         rows ordered (t, v), channels on lanes.
    # w_ref:     (K, Cp, Cp)  conv weight (tap, c_in, c_out) with the BN scale
    #                         already folded into the c_out axis.
    # shift_ref: (1, Cp)      folded per-channel shift ((bias - mean)*scale + beta)
    # o_ref:     (T_out*V, Cp)
    M = T_out * V

    # Temporal conv as K shifted matmuls, accumulated in f32 on the MXU.
    # Tap k consumes input rows [k*V, k*V + M): time shifted by k, all vertices.
    acc = jnp.dot(x_ref[pl.ds(0, M), :], w_ref[0],
                  preferred_element_type=jnp.float32)
    for k in range(1, K):
        acc = acc + jnp.dot(x_ref[pl.ds(k * V, M), :], w_ref[k],
                            preferred_element_type=jnp.float32)

    # Fused (conv-bias + BatchNorm shift) + ReLU.  Dropout == identity (eval).
    o_ref[...] = jnp.maximum(acc + shift_ref[...], 0.0).astype(o_ref.dtype)


def tcn_pallas(x, weight, bias, gamma, beta, running_mean, running_var,
               *, stride=1, eps=1e-5):
    """Forward of TCN.net for x of shape (B, C, T, V) (PyTorch NCHW layout)."""
    B, C, T, V = x.shape
    K = weight.shape[2]                 # 9
    pad = (K - 1) // 2                  # 4
    Cp = 128 * pl.cdiv(C, 128)          # lane-dense channel dim
    Tp = T + 2 * pad
    M = T * V                           # stride-1 output rows per batch element

    # Fold conv bias + BatchNorm (eval mode) into one per-channel affine, then
    # fold the multiplicative part into the conv weights.
    scale = gamma / jnp.sqrt(running_var + eps)           # (C,)
    shift = (bias - running_mean) * scale + beta          # (C,)

    # (B, C, T, V) -> (B, Tp*V, Cp): rows (t, v), channels on lanes, zero pad.
    xt = jnp.transpose(x, (0, 2, 3, 1))                          # (B, T, V, C)
    xt = jnp.pad(xt, ((0, 0), (pad, pad), (0, 0), (0, Cp - C)))  # (B, Tp, V, Cp)
    x_rows = xt.reshape(B, Tp * V, Cp)

    # (C_out, C_in, K, 1) -> (K, C_in, C_out), BN scale folded into c_out,
    # zero padded to (K, Cp, Cp).
    w = jnp.transpose(weight[..., 0], (2, 1, 0)) * scale[None, None, :]
    w = jnp.pad(w, ((0, 0), (0, Cp - C), (0, Cp - C)))
    shift_p = jnp.pad(shift, (0, Cp - C)).reshape(1, Cp)

    kernel = functools.partial(_tcn_kernel, K=K, V=V, T_out=T)

    out = pl.pallas_call(
        kernel,
        out_shape=jax.ShapeDtypeStruct((B, M, Cp), x.dtype),
        grid_spec=pltpu.PrefetchScalarGridSpec(
            num_scalar_prefetch=0,
            grid=(B,),
            in_specs=[
                pl.BlockSpec((None, Tp * V, Cp), lambda b: (b, 0, 0)),
                pl.BlockSpec((K, Cp, Cp), lambda b: (0, 0, 0)),
                pl.BlockSpec((1, Cp), lambda b: (0, 0)),
            ],
            out_specs=pl.BlockSpec((None, M, Cp), lambda b: (b, 0, 0)),
        ),
        compiler_params=pltpu.CompilerParams(
            dimension_semantics=("parallel",)),
    )(x_rows, w, shift_p)

    # (B, M, Cp) -> (B, C, T, V).  A strided conv with these taps equals the
    # stride-1 conv sampled every `stride`-th output (both dims, matching
    # PyTorch's int stride on Conv2d), so apply stride here.
    out = out[:, :, :C].reshape(B, T, V, C).transpose(0, 3, 1, 2)
    if stride != 1:
        out = out[:, :, ::stride, ::stride]
    return out


def tcn_reference(x, weight, bias, gamma, beta, running_mean, running_var,
                  *, stride=1, eps=1e-5):
    """Pure-JAX reference mirroring the PyTorch forward (eval mode)."""
    pad = (weight.shape[2] - 1) // 2
    y = jax.lax.conv_general_dilated(
        x, weight, window_strides=(stride, stride),
        padding=((pad, pad), (0, 0)),
        dimension_numbers=('NCHW', 'OIHW', 'NCHW'))
    y = y + bias[None, :, None, None]
    inv = 1.0 / jnp.sqrt(running_var + eps)
    y = (y - running_mean[None, :, None, None]) * inv[None, :, None, None]
    y = y * gamma[None, :, None, None] + beta[None, :, None, None]
    return jnp.maximum(y, 0.0)


if __name__ == "__main__":
    # Small shapes consistent with the module: feature_dim_size=32 channels,
    # 16 frames, 16 joints, batch 2, temporal kernel 9, stride 1.
    B, C, T, V = 2, 32, 16, 16
    K, stride = 9, 1

    key = jax.random.PRNGKey(0)
    kx, kw, kb, kg, kbe, km, kv = jax.random.split(key, 7)

    x = jax.random.normal(kx, (B, C, T, V), dtype=jnp.float32)
    weight = jax.random.normal(kw, (C, C, K, 1), dtype=jnp.float32) * 0.05
    bias = jax.random.normal(kb, (C,), dtype=jnp.float32) * 0.05
    gamma = 1.0 + 0.1 * jax.random.normal(kg, (C,), dtype=jnp.float32)
    beta = 0.1 * jax.random.normal(kbe, (C,), dtype=jnp.float32)
    running_mean = 0.1 * jax.random.normal(km, (C,), dtype=jnp.float32)
    running_var = jax.random.uniform(kv, (C,), dtype=jnp.float32,
                                     minval=0.5, maxval=1.5)

    y = tcn_pallas(x, weight, bias, gamma, beta, running_mean, running_var,
                   stride=stride)
    y = jax.block_until_ready(y)

    y_ref = tcn_reference(x, weight, bias, gamma, beta, running_mean,
                          running_var, stride=stride)
    assert y.shape == y_ref.shape, "shape mismatch vs reference"
    assert jnp.allclose(y, y_ref, atol=1e-3, rtol=1e-3), "mismatch vs reference"

    print("KERNEL_OK")
</pallas_src>

<mosaic_0001>
module attributes {stable_mosaic.version = 11 : i64} {
  func.func @_tcn_kernel(%arg0: i32, %arg1: memref<1x384x128xf32, #tpu.memory_space<vmem>>, %arg2: memref<9x128x128xf32, #tpu.memory_space<vmem>>, %arg3: memref<1x128xf32, #tpu.memory_space<vmem>>, %arg4: memref<1x256x128xf32, #tpu.memory_space<vmem>>) attributes {dimension_semantics = [#tpu.dimension_semantics<parallel>], iteration_bounds = array<i64: 2>, scalar_prefetch = 0 : i64, scratch_operands = 0 : i64, tpu.core_type = #tpu.core_type<tc>, window_params = [{transform_indices = @transform_0, window_bounds = array<i64: 1, 384, 128>}, {pipeline_mode = #tpu.pipeline_mode<synchronous>, transform_indices = @transform_1, window_bounds = array<i64: 9, 128, 128>}, {pipeline_mode = #tpu.pipeline_mode<synchronous>, transform_indices = @transform_2, window_bounds = array<i64: 1, 128>}, {transform_indices = @transform_3, window_bounds = array<i64: 1, 256, 128>}]} {
    %c0 = arith.constant 0 : index
    %c0_0 = arith.constant 0 : index
    %c0_1 = arith.constant 0 : index
    %0 = vector.load %arg1[%c0, %c0_0, %c0_1] : memref<1x384x128xf32, #tpu.memory_space<vmem>>, vector<1x256x128xf32>
    %1 = vector.shape_cast %0 : vector<1x256x128xf32> to vector<256x128xf32>
    %c0_2 = arith.constant 0 : index
    %c0_3 = arith.constant 0 : index
    %c0_4 = arith.constant 0 : index
    %2 = vector.load %arg2[%c0_2, %c0_3, %c0_4] : memref<9x128x128xf32, #tpu.memory_space<vmem>>, vector<1x128x128xf32>
    %3 = vector.shape_cast %2 : vector<1x128x128xf32> to vector<128x128xf32>
    %cst = arith.constant dense<0.000000e+00> : vector<256x128xf32>
    %4 = tpu.matmul %1, %3, %cst {dimension_numbers = #tpu.dot_dimension_numbers<[1], [0], [0], [1], [0, 0, 1, 1], [], []>} : vector<256x128xf32>, vector<128x128xf32>, vector<256x128xf32> -> vector<256x128xf32>
    %c0_5 = arith.constant 0 : index
    %c16 = arith.constant 16 : index
    %c0_6 = arith.constant 0 : index
    %5 = vector.load %arg1[%c0_5, %c16, %c0_6] : memref<1x384x128xf32, #tpu.memory_space<vmem>>, vector<1x256x128xf32>
    %6 = vector.shape_cast %5 : vector<1x256x128xf32> to vector<256x128xf32>
    %c1 = arith.constant 1 : index
    %c0_7 = arith.constant 0 : index
    %c0_8 = arith.constant 0 : index
    %7 = vector.load %arg2[%c1, %c0_7, %c0_8] : memref<9x128x128xf32, #tpu.memory_space<vmem>>, vector<1x128x128xf32>
    %8 = vector.shape_cast %7 : vector<1x128x128xf32> to vector<128x128xf32>
    %cst_9 = arith.constant dense<0.000000e+00> : vector<256x128xf32>
    %9 = tpu.matmul %6, %8, %cst_9 {dimension_numbers = #tpu.dot_dimension_numbers<[1], [0], [0], [1], [0, 0, 1, 1], [], []>} : vector<256x128xf32>, vector<128x128xf32>, vector<256x128xf32> -> vector<256x128xf32>
    %10 = arith.addf %4, %9 : vector<256x128xf32>
    %c0_10 = arith.constant 0 : index
    %c32 = arith.constant 32 : index
    %c0_11 = arith.constant 0 : index
    %11 = vector.load %arg1[%c0_10, %c32, %c0_11] : memref<1x384x128xf32, #tpu.memory_space<vmem>>, vector<1x256x128xf32>
    %12 = vector.shape_cast %11 : vector<1x256x128xf32> to vector<256x128xf32>
    %c2 = arith.constant 2 : index
    %c0_12 = arith.constant 0 : index
    %c0_13 = arith.constant 0 : index
    %13 = vector.load %arg2[%c2, %c0_12, %c0_13] : memref<9x128x128xf32, #tpu.memory_space<vmem>>, vector<1x128x128xf32>
    %14 = vector.shape_cast %13 : vector<1x128x128xf32> to vector<128x128xf32>
    %cst_14 = arith.constant dense<0.000000e+00> : vector<256x128xf32>
    %15 = tpu.matmul %12, %14, %cst_14 {dimension_numbers = #tpu.dot_dimension_numbers<[1], [0], [0], [1], [0, 0, 1, 1], [], []>} : vector<256x128xf32>, vector<128x128xf32>, vector<256x128xf32> -> vector<256x128xf32>
    %16 = arith.addf %10, %15 : vector<256x128xf32>
    %c0_15 = arith.constant 0 : index
    %c48 = arith.constant 48 : index
    %c0_16 = arith.constant 0 : index
    %17 = vector.load %arg1[%c0_15, %c48, %c0_16] : memref<1x384x128xf32, #tpu.memory_space<vmem>>, vector<1x256x128xf32>
    %18 = vector.shape_cast %17 : vector<1x256x128xf32> to vector<256x128xf32>
    %c3 = arith.constant 3 : index
    %c0_17 = arith.constant 0 : index
    %c0_18 = arith.constant 0 : index
    %19 = vector.load %arg2[%c3, %c0_17, %c0_18] : memref<9x128x128xf32, #tpu.memory_space<vmem>>, vector<1x128x128xf32>
    %20 = vector.shape_cast %19 : vector<1x128x128xf32> to vector<128x128xf32>
    %cst_19 = arith.constant dense<0.000000e+00> : vector<256x128xf32>
    %21 = tpu.matmul %18, %20, %cst_19 {dimension_numbers = #tpu.dot_dimension_numbers<[1], [0], [0], [1], [0, 0, 1, 1], [], []>} : vector<256x128xf32>, vector<128x128xf32>, vector<256x128xf32> -> vector<256x128xf32>
    %22 = arith.addf %16, %21 : vector<256x128xf32>
    %c0_20 = arith.constant 0 : index
    %c64 = arith.constant 64 : index
    %c0_21 = arith.constant 0 : index
    %23 = vector.load %arg1[%c0_20, %c64, %c0_21] : memref<1x384x128xf32, #tpu.memory_space<vmem>>, vector<1x256x128xf32>
    %24 = vector.shape_cast %23 : vector<1x256x128xf32> to vector<256x128xf32>
    %c4 = arith.constant 4 : index
    %c0_22 = arith.constant 0 : index
    %c0_23 = arith.constant 0 : index
    %25 = vector.load %arg2[%c4, %c0_22, %c0_23] : memref<9x128x128xf32, #tpu.memory_space<vmem>>, vector<1x128x128xf32>
    %26 = vector.shape_cast %25 : vector<1x128x128xf32> to vector<128x128xf32>
    %cst_24 = arith.constant dense<0.000000e+00> : vector<256x128xf32>
    %27 = tpu.matmul %24, %26, %cst_24 {dimension_numbers = #tpu.dot_dimension_numbers<[1], [0], [0], [1], [0, 0, 1, 1], [], []>} : vector<256x128xf32>, vector<128x128xf32>, vector<256x128xf32> -> vector<256x128xf32>
    %28 = arith.addf %22, %27 : vector<256x128xf32>
    %c0_25 = arith.constant 0 : index
    %c80 = arith.constant 80 : index
    %c0_26 = arith.constant 0 : index
    %29 = vector.load %arg1[%c0_25, %c80, %c0_26] : memref<1x384x128xf32, #tpu.memory_space<vmem>>, vector<1x256x128xf32>
    %30 = vector.shape_cast %29 : vector<1x256x128xf32> to vector<256x128xf32>
    %c5 = arith.constant 5 : index
    %c0_27 = arith.constant 0 : index
    %c0_28 = arith.constant 0 : index
    %31 = vector.load %arg2[%c5, %c0_27, %c0_28] : memref<9x128x128xf32, #tpu.memory_space<vmem>>, vector<1x128x128xf32>
    %32 = vector.shape_cast %31 : vector<1x128x128xf32> to vector<128x128xf32>
    %cst_29 = arith.constant dense<0.000000e+00> : vector<256x128xf32>
    %33 = tpu.matmul %30, %32, %cst_29 {dimension_numbers = #tpu.dot_dimension_numbers<[1], [0], [0], [1], [0, 0, 1, 1], [], []>} : vector<256x128xf32>, vector<128x128xf32>, vector<256x128xf32> -> vector<256x128xf32>
    %34 = arith.addf %28, %33 : vector<256x128xf32>
    %c0_30 = arith.constant 0 : index
    %c96 = arith.constant 96 : index
    %c0_31 = arith.constant 0 : index
    %35 = vector.load %arg1[%c0_30, %c96, %c0_31] : memref<1x384x128xf32, #tpu.memory_space<vmem>>, vector<1x256x128xf32>
    %36 = vector.shape_cast %35 : vector<1x256x128xf32> to vector<256x128xf32>
    %c6 = arith.constant 6 : index
    %c0_32 = arith.constant 0 : index
    %c0_33 = arith.constant 0 : index
    %37 = vector.load %arg2[%c6, %c0_32, %c0_33] : memref<9x128x128xf32, #tpu.memory_space<vmem>>, vector<1x128x128xf32>
    %38 = vector.shape_cast %37 : vector<1x128x128xf32> to vector<128x128xf32>
    %cst_34 = arith.constant dense<0.000000e+00> : vector<256x128xf32>
    %39 = tpu.matmul %36, %38, %cst_34 {dimension_numbers = #tpu.dot_dimension_numbers<[1], [0], [0], [1], [0, 0, 1, 1], [], []>} : vector<256x128xf32>, vector<128x128xf32>, vector<256x128xf32> -> vector<256x128xf32>
    %40 = arith.addf %34, %39 : vector<256x128xf32>
    %c0_35 = arith.constant 0 : index
    %c112 = arith.constant 112 : index
    %c0_36 = arith.constant 0 : index
    %41 = vector.load %arg1[%c0_35, %c112, %c0_36] : memref<1x384x128xf32, #tpu.memory_space<vmem>>, vector<1x256x128xf32>
    %42 = vector.shape_cast %41 : vector<1x256x128xf32> to vector<256x128xf32>
    %c7 = arith.constant 7 : index
    %c0_37 = arith.constant 0 : index
    %c0_38 = arith.constant 0 : index
    %43 = vector.load %arg2[%c7, %c0_37, %c0_38] : memref<9x128x128xf32, #tpu.memory_space<vmem>>, vector<1x128x128xf32>
    %44 = vector.shape_cast %43 : vector<1x128x128xf32> to vector<128x128xf32>
    %cst_39 = arith.constant dense<0.000000e+00> : vector<256x128xf32>
    %45 = tpu.matmul %42, %44, %cst_39 {dimension_numbers = #tpu.dot_dimension_numbers<[1], [0], [0], [1], [0, 0, 1, 1], [], []>} : vector<256x128xf32>, vector<128x128xf32>, vector<256x128xf32> -> vector<256x128xf32>
    %46 = arith.addf %40, %45 : vector<256x128xf32>
    %c0_40 = arith.constant 0 : index
    %c128 = arith.constant 128 : index
    %c0_41 = arith.constant 0 : index
    %47 = vector.load %arg1[%c0_40, %c128, %c0_41] : memref<1x384x128xf32, #tpu.memory_space<vmem>>, vector<1x256x128xf32>
    %48 = vector.shape_cast %47 : vector<1x256x128xf32> to vector<256x128xf32>
    %c8 = arith.constant 8 : index
    %c0_42 = arith.constant 0 : index
    %c0_43 = arith.constant 0 : index
    %49 = vector.load %arg2[%c8, %c0_42, %c0_43] : memref<9x128x128xf32, #tpu.memory_space<vmem>>, vector<1x128x128xf32>
    %50 = vector.shape_cast %49 : vector<1x128x128xf32> to vector<128x128xf32>
    %cst_44 = arith.constant dense<0.000000e+00> : vector<256x128xf32>
    %51 = tpu.matmul %48, %50, %cst_44 {dimension_numbers = #tpu.dot_dimension_numbers<[1], [0], [0], [1], [0, 0, 1, 1], [], []>} : vector<256x128xf32>, vector<128x128xf32>, vector<256x128xf32> -> vector<256x128xf32>
    %52 = arith.addf %46, %51 : vector<256x128xf32>
    %c0_45 = arith.constant 0 : index
    %c0_46 = arith.constant 0 : index
    %53 = vector.load %arg3[%c0_45, %c0_46] : memref<1x128xf32, #tpu.memory_space<vmem>>, vector<1x128xf32>
    %54 = vector.broadcast %53 : vector<1x128xf32> to vector<256x128xf32>
    %55 = arith.addf %52, %54 : vector<256x128xf32>
    %cst_47 = arith.constant 0.000000e+00 : f32
    %56 = vector.broadcast %cst_47 : f32 to vector<256x128xf32>
    %57 = arith.maximumf %55, %56 : vector<256x128xf32>
    %c0_48 = arith.constant 0 : index
    %c0_49 = arith.constant 0 : index
    %c0_50 = arith.constant 0 : index
    %58 = vector.load %arg4[%c0_48, %c0_49, %c0_50] : memref<1x256x128xf32, #tpu.memory_space<vmem>>, vector<1x256x128xf32>
    %59 = vector.shape_cast %58 : vector<1x256x128xf32> to vector<256x128xf32>
    %60 = vector.shape_cast %57 : vector<256x128xf32> to vector<1x256x128xf32>
    tpu.vector_store %arg4[%c0_48, %c0_49, %c0_50], %60 {strides = array<i32>} : memref<1x256x128xf32, #tpu.memory_space<vmem>>, vector<1x256x128xf32>,
    return
  }
  func.func @transform_0(%arg0: i32) -> (i32, i32, i32) {
    %c0_i32 = arith.constant 0 : i32
    %c0_i32_0 = arith.constant 0 : i32
    %c0_i32_1 = arith.constant 0 : i32
    return %arg0, %c0_i32, %c0_i32_0 : i32, i32, i32
  }
  func.func @transform_1(%arg0: i32) -> (i32, i32, i32) {
    %c0_i32 = arith.constant 0 : i32
    %c0_i32_0 = arith.constant 0 : i32
    %c0_i32_1 = arith.constant 0 : i32
    %c0_i32_2 = arith.constant 0 : i32
    return %c0_i32, %c0_i32_0, %c0_i32_1 : i32, i32, i32
  }
  func.func @transform_2(%arg0: i32) -> (i32, i32) {
    %c0_i32 = arith.constant 0 : i32
    %c0_i32_0 = arith.constant 0 : i32
    %c0_i32_1 = arith.constant 0 : i32
    return %c0_i32, %c0_i32_0 : i32, i32
  }
  func.func @transform_3(%arg0: i32) -> (i32, i32, i32) {
    %c0_i32 = arith.constant 0 : i32
    %c0_i32_0 = arith.constant 0 : i32
    %c0_i32_1 = arith.constant 0 : i32
    return %arg0, %c0_i32, %c0_i32_0 : i32, i32, i32
  }
}

</mosaic_0001>

<llo_original>
// kernel: tpu_custom_call.1
$region0: #{tpu_custom_call.1}
  #allocation0 [shape = 'u32[]', space=smem, size = 0x4, offset = 0x4, fixed_abs, tag = 'smem constant byte address 0x4 - core index']
  #allocation1 [shape = 'u32[72,128]{1,0:T(1,128)}', space=vmem, size = 0x9000, scoped, tag = 'internal scratch']
  %s0 = inlined_call_operand.hbm [shape: f32[2,384,128], index: 0, kind: input, shape index: {}]
  %s1 = inlined_call_operand.hbm [shape: f32[9,128,128], index: 1, kind: input, shape index: {}]
  %s2 = inlined_call_operand.vmem [shape: f32[1,128], index: 2, kind: input, shape index: {}]
  %s3 = inlined_call_operand.hbm [shape: f32[2,256,128], index: 3, kind: output, shape index: {}]
  %s4 = sld [smem:[#allocation0]]
  $region53: #{tpu_custom_call.1} parent=0
    _
  %s6 = ssub.s32 1, %s4
  %s7 = scalar_select 0, %s6, %s4
  $region1: #{tpu_custom_call.1} parent=0
    #allocation2 [shape = 'u8[393216]{0}', space=vmem, size = 0x60000, scoped, tag = 'input window, operand 0']
    #allocation3 [shape = 's32[2]{0}', space=sflag, size = 0x8, scoped, tag = 'scoped memory for tpu_custom_call.1']
    #allocation4 [shape = 's32[2]{0}', space=sflag, size = 0x8, scoped, tag = 'scoped memory for tpu_custom_call.1']
    #allocation5 [shape = 'u8[589824]{0}', space=vmem, size = 0x90000, scoped, tag = 'input window, operand 1, single buffered']
    #allocation6 [shape = 's32[1]{0}', space=sflag, size = 0x4, scoped, tag = 'scoped memory for tpu_custom_call.1']
    #allocation7 [shape = 'u8[262144]{0}', space=vmem, size = 0x40000, scoped, tag = 'output window, operand 0']
    %8 = vsyncpa [#allocation3], 0
    %s9 = scalar_lea.sflag [#allocation3], 1
    %10 = vsyncpa %s9, 0
    %11 = vsyncpa [#allocation6], 0
    %12 = vsyncpa [#allocation4], 0
    %s13 = scalar_lea.sflag [#allocation4], 1
    %14 = vsyncpa %s13, 0
    loop: start=0, step=1, limit=4
    $region2: #{tpu_custom_call.1} parent=1 // loop_pre_header
      _
    $region3: #{tpu_custom_call.1} parent=1 // loop_header
      %s16 = sphi 0, %s20
      %p17 = scmp.ge.s32.totalorder %s16, 4
      %s26 = sphi 0, %s28
      %s29 = sphi 0, %s26
      %s30 = sphi 0, %s29
      %s46 = sphi 0, %s30
      %s50 = sphi 0, %s50
      %s52 = sphi 0, %s50
      %s53 = sphi 0, %s52
      %s67 = sphi 0, %s53
      %s71 = sphi 0, %s71
      %s73 = sphi 0, %s71
      %s74 = sphi 0, %s73
      %s88 = sphi 0, %s74
      %s94 = sphi 0, %s96
      %s97 = sphi 0, %s94
      %s98 = sphi 0, %s97
      %s114 = sphi 0, %s98
    $region4: #{tpu_custom_call.1} parent=1 // loop_header_branch
      %19 = sbr.rel (%p17) target = $region8
    $region5: #{tpu_custom_call.1} parent=1 // loop_body
      %s21 = ssub.s32 %s16, 1
      %s22 = ssub.s32 %s16, 2
      %s23 = sadd.s32 %s16, 1
      %s24 = ssub.s32 %s16, %s23
      %p25 = scmp.eq.s32.totalorder %s24, 0
      %s27 = sadd.s32 %s26, 1
      %s28 = scalar_select %p25, %s26, %s27
      %p31 = pneg %p25
      %p32 = scmp.eq.s32.totalorder %s16, 1
      %p33 = por %p31, %p32
      %p34 = scmp.ne.s32.totalorder %s26, %s29
      %p35 = scmp.eq.s32.totalorder %s16, 0
      %p36 = por %p34, %p35
      %p37 = scmp.ne.s32.totalorder %s26, %s29
      %p38 = scmp.eq.s32.totalorder %s21, 1
      %p39 = por %p37, %p38
      %p40 = scmp.ne.s32.totalorder %s29, %s30
      %p41 = scmp.eq.s32.totalorder %s21, 0
      %p42 = por %p40, %p41
      %p43 = scmp.ne.s32.totalorder %s29, %s30
      %p44 = scmp.eq.s32.totalorder %s22, 1
      %p45 = por %p43, %p44
      %p47 = scmp.ne.s32.totalorder %s30, %s46
      %p48 = scmp.eq.s32.totalorder %s22, 0
      %p49 = por %p47, %p48
      %s51 = sadd.s32 %s50, 1
      %p54 = scmp.eq.s32.totalorder %s16, 1
      %p55 = scmp.ne.s32.totalorder %s50, %s52
      %p56 = scmp.eq.s32.totalorder %s16, 0
      %p57 = por %p55, %p56
      %p58 = scmp.ne.s32.totalorder %s50, %s52
      %p59 = scmp.eq.s32.totalorder %s21, 1
      %p60 = por %p58, %p59
      %p61 = scmp.ne.s32.totalorder %s52, %s53
      %p62 = scmp.eq.s32.totalorder %s21, 0
      %p63 = por %p61, %p62
      %p64 = scmp.ne.s32.totalorder %s52, %s53
      %p65 = scmp.eq.s32.totalorder %s22, 1
      %p66 = por %p64, %p65
      %p68 = scmp.ne.s32.totalorder %s53, %s67
      %p69 = scmp.eq.s32.totalorder %s22, 0
      %p70 = por %p68, %p69
      %s72 = sadd.s32 %s71, 1
      %p75 = scmp.eq.s32.totalorder %s16, 1
      %p76 = scmp.ne.s32.totalorder %s71, %s73
      %p77 = scmp.eq.s32.totalorder %s16, 0
      %p78 = por %p76, %p77
      %p79 = scmp.ne.s32.totalorder %s71, %s73
      %p80 = scmp.eq.s32.totalorder %s21, 1
      %p81 = por %p79, %p80
      %p82 = scmp.ne.s32.totalorder %s73, %s74
      %p83 = scmp.eq.s32.totalorder %s21, 0
      %p84 = por %p82, %p83
      %p85 = scmp.ne.s32.totalorder %s73, %s74
      %p86 = scmp.eq.s32.totalorder %s22, 1
      %p87 = por %p85, %p86
      %p89 = scmp.ne.s32.totalorder %s74, %s88
      %p90 = scmp.eq.s32.totalorder %s22, 0
      %p91 = por %p89, %p90
      %s92 = ssub.s32 %s16, %s23
      %p93 = scmp.eq.s32.totalorder %s92, 0
      %s95 = sadd.s32 %s94, 1
      %s96 = scalar_select %p93, %s94, %s95
      %p99 = pneg %p93
      %p100 = scmp.eq.s32.totalorder %s16, 1
      %p101 = por %p99, %p100
      %p102 = scmp.ne.s32.totalorder %s94, %s97
      %p103 = scmp.eq.s32.totalorder %s16, 0
      %p104 = por %p102, %p103
      %p105 = scmp.ne.s32.totalorder %s94, %s97
      %p106 = scmp.eq.s32.totalorder %s21, 1
      %p107 = por %p105, %p106
      %p108 = scmp.ne.s32.totalorder %s97, %s98
      %p109 = scmp.eq.s32.totalorder %s21, 0
      %p110 = por %p108, %p109
      %p111 = scmp.ne.s32.totalorder %s97, %s98
      %p112 = scmp.eq.s32.totalorder %s22, 1
      %p113 = por %p111, %p112
      %p115 = scmp.ne.s32.totalorder %s98, %s114
      %p116 = scmp.eq.s32.totalorder %s22, 0
      %p117 = por %p115, %p116
      %p118 = scmp.le.s32.totalorder 1, %s16
      %p119 = scmp.lt.s32.totalorder %s16, 3
      %p120 = pnand %p118, %p119
      %p121 = pneg %p120
      // Predicated region
      $region9: #{tpu_custom_call.1} parent=5 // pred_check
        _
      $region10: #{tpu_custom_call.1} parent=5 // pred_check_branch
        %123 = sbr.rel (%p120) target = $region12
      $region11: #{tpu_custom_call.1} parent=5 // pred_region
        %s124 = ssub.s32 %s16, 1
        // Predicated region
        $region13: #{tpu_custom_call.1} parent=11 // pred_check
          %p125 = pneg %p63
        $region14: #{tpu_custom_call.1} parent=11 // pred_check_branch
          %127 = sbr.rel (%p125) target = $region16
        $region15: #{tpu_custom_call.1} parent=11 // pred_region
          %129 = vsyncadd [#allocation6], 0
          %s130 = sshll.u32 %s1, 4
          %s131 = int_to_ptr.hbm [resolvable:$true] %s130
          %s132 = sshll.u32 [#allocation5], 4
          %s133 = int_to_ptr.vmem [resolvable:$true] %s132
          %138 = dma.hbm_to_vmem [thread:$0]  %s131, 18432, %s133, [#allocation6], 128, 128, 8
        $region16: #{tpu_custom_call.1} parent=11 // pred_fallthru
          _
        // Predicated region
        $region17: #{tpu_custom_call.1} parent=11 // pred_check
          %p139 = pneg %p84
        $region18: #{tpu_custom_call.1} parent=11 // pred_check_branch
          %141 = sbr.rel (%p139) target = $region20
        $region19: #{tpu_custom_call.1} parent=11 // pred_region
          _
        $region20: #{tpu_custom_call.1} parent=11 // pred_fallthru
          _
      $region12: #{tpu_custom_call.1} parent=5 // pred_fallthru
        _
      %p142 = scmp.lt.s32.totalorder %s16, 2
      // Predicated region
      $region21: #{tpu_custom_call.1} parent=5 // pred_check
        %p143 = pneg %p142
      $region22: #{tpu_custom_call.1} parent=5 // pred_check_branch
        %145 = sbr.rel (%p143) target = $region24
      $region23: #{tpu_custom_call.1} parent=5 // pred_region
        // Predicated region
        $region25: #{tpu_custom_call.1} parent=23 // pred_check
          %p146 = pneg %p36
        $region26: #{tpu_custom_call.1} parent=23 // pred_check_branch
          %148 = sbr.rel (%p146) target = $region28
        $region27: #{tpu_custom_call.1} parent=23 // pred_region
          %s149 = sand.u32 %s26, 1
          %s150 = scalar_lea.sflag [#allocation3], %s149
          %s151 = sand.u32 %s26, 1
          %s152 = smul.addr %s151, 384
          %s153 = scalar_lea.vmem [#allocation2], %s152
          %155 = vsyncadd %s150, 0
          %s156 = smul.addr %s16, 48
          %s157 = smul.addr %s156, 8
          %s158 = scalar_lea.hbm %s0, %s157
          %s159 = sshll.u32 %s158, 4
          %s160 = int_to_ptr.hbm [resolvable:$true] %s159
          %s161 = sshll.u32 %s153, 4
          %s162 = int_to_ptr.vmem [resolvable:$true] %s161
          %167 = dma.hbm_to_vmem [thread:$0]  %s160, 6144, %s162, %s150, 128, 128, 8
        $region28: #{tpu_custom_call.1} parent=23 // pred_fallthru
          _
      $region24: #{tpu_custom_call.1} parent=5 // pred_fallthru
        _
      %p168 = scmp.le.s32.totalorder 1, %s16
      %p169 = scmp.lt.s32.totalorder %s16, 3
      %p170 = pnand %p168, %p169
      %p171 = pneg %p170
      // Predicated region
      $region29: #{tpu_custom_call.1} parent=5 // pred_check
        _
      $region30: #{tpu_custom_call.1} parent=5 // pred_check_branch
        %173 = sbr.rel (%p170) target = $region32
      $region31: #{tpu_custom_call.1} parent=5 // pred_region
        %s174 = ssub.s32 %s16, 1
        %s175 = sand.u32 %s29, 1
        %s176 = scalar_lea.sflag [#allocation3], %s175
        %s177 = sand.u32 %s29, 1
        %s178 = smul.addr %s177, 384
        %s179 = scalar_lea.vmem [#allocation2], %s178
        // Predicated region
        $region33: #{tpu_custom_call.1} parent=31 // pred_check
          %p180 = pneg %p42
        $region34: #{tpu_custom_call.1} parent=31 // pred_check_branch
          %182 = sbr.rel (%p180) target = $region36
        $region35: #{tpu_custom_call.1} parent=31 // pred_region
          %184 = dma.done %s176, 6144
        $region36: #{tpu_custom_call.1} parent=31 // pred_fallthru
          _
        // Predicated region
        $region37: #{tpu_custom_call.1} parent=31 // pred_check
          %p185 = pneg %p63
        $region38: #{tpu_custom_call.1} parent=31 // pred_check_branch
          %187 = sbr.rel (%p185) target = $region40
        $region39: #{tpu_custom_call.1} parent=31 // pred_region
          %189 = dma.done [#allocation6], 18432
        $region40: #{tpu_custom_call.1} parent=31 // pred_fallthru
          _
        %s190 = sand.u32 %s29, 1
        %s191 = scalar_lea.sflag [#allocation3], %s190
        %s192 = sand.u32 %s29, 1
        %s193 = smul.addr %s192, 384
        %s194 = scalar_lea.vmem [#allocation2], %s193
        %p195 = pneg %p42
        %p196 = pneg %p39
        %p197 = pneg %p63
        %p198 = pneg %p60
        %p199 = pneg %p84
        %p200 = pneg %p81
        %p201 = pneg %p110
        %p202 = pneg %p107
        %s203 = sand.u32 %s97, 1
        %s204 = scalar_lea.sflag [#allocation4], %s203
        %s205 = sand.u32 %s97, 1
        %s206 = smul.addr %s205, 256
        %s207 = scalar_lea.vmem [#allocation7], %s206
        %v208 = vld [vmem:[%s179] sm:$0xff]
        %v209 = vld [vmem:[%s179 + $0x8] sm:$0xff]
        %v210 = vld [vmem:[%s179 + $0x10] sm:$0xff]
        %v211 = vld [vmem:[%s179 + $0x18] sm:$0xff]
        %v212 = vld [vmem:[%s179 + $0x20] sm:$0xff]
        %v213 = vld [vmem:[%s179 + $0x28] sm:$0xff]
        %v214 = vld [vmem:[%s179 + $0x30] sm:$0xff]
        %v215 = vld [vmem:[%s179 + $0x38] sm:$0xff]
        %v216 = vld [vmem:[%s179 + $0x40] sm:$0xff]
        %v217 = vld [vmem:[%s179 + $0x48] sm:$0xff]
        %v218 = vld [vmem:[%s179 + $0x50] sm:$0xff]
        %v219 = vld [vmem:[%s179 + $0x58] sm:$0xff]
        %v220 = vld [vmem:[%s179 + $0x60] sm:$0xff]
        %v221 = vld [vmem:[%s179 + $0x68] sm:$0xff]
        %v222 = vld [vmem:[%s179 + $0x70] sm:$0xff]
        %v223 = vld [vmem:[%s179 + $0x78] sm:$0xff]
        %v224 = vld [vmem:[%s179 + $0x80] sm:$0xff]
        %v225 = vld [vmem:[%s179 + $0x88] sm:$0xff]
        %v226 = vld [vmem:[%s179 + $0x90] sm:$0xff]
        %v227 = vld [vmem:[%s179 + $0x98] sm:$0xff]
        %v228 = vld [vmem:[%s179 + $0xa0] sm:$0xff]
        %v229 = vld [vmem:[%s179 + $0xa8] sm:$0xff]
        %v230 = vld [vmem:[%s179 + $0xb0] sm:$0xff]
        %v231 = vld [vmem:[%s179 + $0xb8] sm:$0xff]
        %v232 = vld [vmem:[%s179 + $0xc0] sm:$0xff]
        %v233 = vld [vmem:[%s179 + $0xc8] sm:$0xff]
        %v234 = vld [vmem:[%s179 + $0xd0] sm:$0xff]
        %v235 = vld [vmem:[%s179 + $0xd8] sm:$0xff]
        %v236 = vld [vmem:[%s179 + $0xe0] sm:$0xff]
        %v237 = vld [vmem:[%s179 + $0xe8] sm:$0xff]
        %v238 = vld [vmem:[%s179 + $0xf0] sm:$0xff]
        %v239 = vld [vmem:[%s179 + $0xf8] sm:$0xff]
        %v240 = vld [vmem:[#allocation5] sm:$0xff]
        %v241 = vld [vmem:[#allocation5 + $0x8] sm:$0xff]
        %v242 = vld [vmem:[#allocation5 + $0x10] sm:$0xff]
        %v243 = vld [vmem:[#allocation5 + $0x18] sm:$0xff]
        %v244 = vld [vmem:[#allocation5 + $0x20] sm:$0xff]
        %v245 = vld [vmem:[#allocation5 + $0x28] sm:$0xff]
        %v246 = vld [vmem:[#allocation5 + $0x30] sm:$0xff]
        %v247 = vld [vmem:[#allocation5 + $0x38] sm:$0xff]
        %v248 = vld [vmem:[#allocation5 + $0x40] sm:$0xff]
        %v249 = vld [vmem:[#allocation5 + $0x48] sm:$0xff]
        %v250 = vld [vmem:[#allocation5 + $0x50] sm:$0xff]
        %v251 = vld [vmem:[#allocation5 + $0x58] sm:$0xff]
        %v252 = vld [vmem:[#allocation5 + $0x60] sm:$0xff]
        %v253 = vld [vmem:[#allocation5 + $0x68] sm:$0xff]
        %v254 = vld [vmem:[#allocation5 + $0x70] sm:$0xff]
        %v255 = vld [vmem:[#allocation5 + $0x78] sm:$0xff]
        %v256 = vld [vmem:[%s179 + $0x100] sm:$0xff]
        %v257 = vld [vmem:[%s179 + $0x108] sm:$0xff]
        %s258 = scalar_lea.vmem [#allocation5], 128
        %v259 = vld [vmem:[%s258] sm:$0xff]
        %v260 = vld [vmem:[%s258 + $0x8] sm:$0xff]
        %v261 = vld [vmem:[%s258 + $0x10] sm:$0xff]
        %v262 = vld [vmem:[%s258 + $0x18] sm:$0xff]
        %v263 = vld [vmem:[%s258 + $0x20] sm:$0xff]
        %v264 = vld [vmem:[%s258 + $0x28] sm:$0xff]
        %v265 = vld [vmem:[%s258 + $0x30] sm:$0xff]
        %v266 = vld [vmem:[%s258 + $0x38] sm:$0xff]
        %v267 = vld [vmem:[%s258 + $0x40] sm:$0xff]
        %v268 = vld [vmem:[%s258 + $0x48] sm:$0xff]
        %v269 = vld [vmem:[%s258 + $0x50] sm:$0xff]
        %v270 = vld [vmem:[%s258 + $0x58] sm:$0xff]
        %v271 = vld [vmem:[%s258 + $0x60] sm:$0xff]
        %v272 = vld [vmem:[%s258 + $0x68] sm:$0xff]
        %v273 = vld [vmem:[%s258 + $0x70] sm:$0xff]
        %v274 = vld [vmem:[%s258 + $0x78] sm:$0xff]
        %275 = vmatpush.msra.mxu0 %v274
        %276 = vmatpush.msra.mxu0 %v273
        %277 = vmatpush.msra.mxu0 %v272
        %278 = vmatpush.msra.mxu0 %v271
        %279 = vmatpush.msra.mxu0 %v270
        %280 = vmatpush.msra.mxu0 %v269
        %281 = vmatpush.msra.mxu0 %v268
        %282 = vmatpush.msra.mxu0 %v267
        %283 = vmatpush.msra.mxu0 %v266
        %284 = vmatpush.msra.mxu0 %v265
        %285 = vmatpush.msra.mxu0 %v264
        %286 = vmatpush.msra.mxu0 %v263
        %287 = vmatpush.msra.mxu0 %v262
        %288 = vmatpush.msra.mxu0 %v261
        %289 = vmatpush.msra.mxu0 %v260
        %290 = vmatpush.msra.mxu0 %v259
        %291 = vmatmul.f32.gmra.mxu0 %v210
        %v292 = vpop.f32.mrf.mxu0
        %v293 = vadd.f32 0.0, %v292
        %294 = vmatmul.f32.gmra.mxu0 %v211
        %v295 = vpop.f32.mrf.mxu0
        %v296 = vadd.f32 0.0, %v295
        %297 = vmatmul.f32.gmra.mxu0 %v212
        %v298 = vpop.f32.mrf.mxu0
        %v299 = vadd.f32 0.0, %v298
        %300 = vmatmul.f32.gmra.mxu0 %v213
        %v301 = vpop.f32.mrf.mxu0
        %v302 = vadd.f32 0.0, %v301
        %303 = vmatmul.f32.gmra.mxu0 %v214
        %v304 = vpop.f32.mrf.mxu0
        %v305 = vadd.f32 0.0, %v304
        %306 = vmatmul.f32.gmra.mxu0 %v215
        %v307 = vpop.f32.mrf.mxu0
        %v308 = vadd.f32 0.0, %v307
        %309 = vmatmul.f32.gmra.mxu0 %v216
        %v310 = vpop.f32.mrf.mxu0
        %v311 = vadd.f32 0.0, %v310
        %312 = vmatmul.f32.gmra.mxu0 %v217
        %v313 = vpop.f32.mrf.mxu0
        %v314 = vadd.f32 0.0, %v313
        %315 = vmatmul.f32.gmra.mxu0 %v218
        %v316 = vpop.f32.mrf.mxu0
        %v317 = vadd.f32 0.0, %v316
        %318 = vmatmul.f32.gmra.mxu0 %v219
        %v319 = vpop.f32.mrf.mxu0
        %v320 = vadd.f32 0.0, %v319
        %321 = vmatmul.f32.gmra.mxu0 %v220
        %v322 = vpop.f32.mrf.mxu0
        %v323 = vadd.f32 0.0, %v322
        %324 = vmatmul.f32.gmra.mxu0 %v221
        %v325 = vpop.f32.mrf.mxu0
        %v326 = vadd.f32 0.0, %v325
        %327 = vmatmul.f32.gmra.mxu0 %v222
        %v328 = vpop.f32.mrf.mxu0
        %v329 = vadd.f32 0.0, %v328
        %330 = vmatmul.f32.gmra.mxu0 %v223
        %v331 = vpop.f32.mrf.mxu0
        %v332 = vadd.f32 0.0, %v331
        %333 = vmatmul.f32.gmra.mxu0 %v224
        %v334 = vpop.f32.mrf.mxu0
        %v335 = vadd.f32 0.0, %v334
        %336 = vmatmul.f32.gmra.mxu0 %v225
        %v337 = vpop.f32.mrf.mxu0
        %v338 = vadd.f32 0.0, %v337
        %339 = vmatmul.f32.gmra.mxu0 %v226
        %v340 = vpop.f32.mrf.mxu0
        %v341 = vadd.f32 0.0, %v340
        %342 = vmatmul.f32.gmra.mxu0 %v227
        %v343 = vpop.f32.mrf.mxu0
        %v344 = vadd.f32 0.0, %v343
        %345 = vmatmul.f32.gmra.mxu0 %v228
        %v346 = vpop.f32.mrf.mxu0
        %v347 = vadd.f32 0.0, %v346
        %348 = vmatmul.f32.gmra.mxu0 %v229
        %v349 = vpop.f32.mrf.mxu0
        %v350 = vadd.f32 0.0, %v349
        %351 = vmatmul.f32.gmra.mxu0 %v230
        %v352 = vpop.f32.mrf.mxu0
        %v353 = vadd.f32 0.0, %v352
        %354 = vmatmul.f32.gmra.mxu0 %v231
        %v355 = vpop.f32.mrf.mxu0
        %v356 = vadd.f32 0.0, %v355
        %357 = vmatmul.f32.gmra.mxu0 %v232
        %v358 = vpop.f32.mrf.mxu0
        %v359 = vadd.f32 0.0, %v358
        %360 = vmatmul.f32.gmra.mxu0 %v233
        %v361 = vpop.f32.mrf.mxu0
        %v362 = vadd.f32 0.0, %v361
        %363 = vmatmul.f32.gmra.mxu0 %v234
        %v364 = vpop.f32.mrf.mxu0
        %v365 = vadd.f32 0.0, %v364
        %366 = vmatmul.f32.gmra.mxu0 %v235
        %v367 = vpop.f32.mrf.mxu0
        %v368 = vadd.f32 0.0, %v367
        %369 = vmatmul.f32.gmra.mxu0 %v236
        %v370 = vpop.f32.mrf.mxu0
        %v371 = vadd.f32 0.0, %v370
        %372 = vmatmul.f32.gmra.mxu0 %v237
        %v373 = vpop.f32.mrf.mxu0
        %v374 = vadd.f32 0.0, %v373
        %375 = vmatmul.f32.gmra.mxu0 %v238
        %v376 = vpop.f32.mrf.mxu0
        %v377 = vadd.f32 0.0, %v376
        %378 = vmatmul.f32.gmra.mxu0 %v239
        %v379 = vpop.f32.mrf.mxu0
        %v380 = vadd.f32 0.0, %v379
        %381 = vmatmul.f32.gmra.mxu0 %v256
        %v382 = vpop.f32.mrf.mxu0
        %v383 = vadd.f32 0.0, %v382
        %384 = vmatmul.f32.gmra.mxu0 %v257
        %v385 = vpop.f32.mrf.mxu0
        %v386 = vadd.f32 0.0, %v385
        %387 = vdwg.mxu0
        %388 = vmatpush.msra.mxu0 %v255
        %389 = vmatpush.msra.mxu0 %v254
        %390 = vmatpush.msra.mxu0 %v253
        %391 = vmatpush.msra.mxu0 %v252
        %392 = vmatpush.msra.mxu0 %v251
        %393 = vmatpush.msra.mxu0 %v250
        %394 = vmatpush.msra.mxu0 %v249
        %395 = vmatpush.msra.mxu0 %v248
        %396 = vmatpush.msra.mxu0 %v247
        %397 = vmatpush.msra.mxu0 %v246
        %398 = vmatpush.msra.mxu0 %v245
        %399 = vmatpush.msra.mxu0 %v244
        %400 = vmatpush.msra.mxu0 %v243
        %401 = vmatpush.msra.mxu0 %v242
        %402 = vmatpush.msra.mxu0 %v241
        %403 = vmatpush.msra.mxu0 %v240
        %404 = vmatmul.f32.gmra.mxu0 %v208
        %v405 = vpop.f32.mrf.mxu0
        %v406 = vadd.f32 %v293, %v405
        %407 = vmatmul.f32.gmra.mxu0 %v209
        %v408 = vpop.f32.mrf.mxu0
        %v409 = vadd.f32 %v296, %v408
        %410 = vmatmul.f32.gmra.mxu0 %v210
        %v411 = vpop.f32.mrf.mxu0
        %v412 = vadd.f32 %v299, %v411
        %413 = vmatmul.f32.gmra.mxu0 %v211
        %v414 = vpop.f32.mrf.mxu0
        %v415 = vadd.f32 %v302, %v414
        %416 = vmatmul.f32.gmra.mxu0 %v212
        %v417 = vpop.f32.mrf.mxu0
        %v418 = vadd.f32 %v305, %v417
        %419 = vmatmul.f32.gmra.mxu0 %v213
        %v420 = vpop.f32.mrf.mxu0
        %v421 = vadd.f32 %v308, %v420
        %422 = vmatmul.f32.gmra.mxu0 %v214
        %v423 = vpop.f32.mrf.mxu0
        %v424 = vadd.f32 %v311, %v423
        %425 = vmatmul.f32.gmra.mxu0 %v215
        %v426 = vpop.f32.mrf.mxu0
        %v427 = vadd.f32 %v314, %v426
        %428 = vmatmul.f32.gmra.mxu0 %v216
        %v429 = vpop.f32.mrf.mxu0
        %v430 = vadd.f32 %v317, %v429
        %431 = vmatmul.f32.gmra.mxu0 %v217
        %v432 = vpop.f32.mrf.mxu0
        %v433 = vadd.f32 %v320, %v432
        %434 = vmatmul.f32.gmra.mxu0 %v218
        %v435 = vpop.f32.mrf.mxu0
        %v436 = vadd.f32 %v323, %v435
        %437 = vmatmul.f32.gmra.mxu0 %v219
        %v438 = vpop.f32.mrf.mxu0
        %v439 = vadd.f32 %v326, %v438
        %440 = vmatmul.f32.gmra.mxu0 %v220
        %v441 = vpop.f32.mrf.mxu0
        %v442 = vadd.f32 %v329, %v441
        %443 = vmatmul.f32.gmra.mxu0 %v221
        %v444 = vpop.f32.mrf.mxu0
        %v445 = vadd.f32 %v332, %v444
        %446 = vmatmul.f32.gmra.mxu0 %v222
        %v447 = vpop.f32.mrf.mxu0
        %v448 = vadd.f32 %v335, %v447
        %449 = vmatmul.f32.gmra.mxu0 %v223
        %v450 = vpop.f32.mrf.mxu0
        %v451 = vadd.f32 %v338, %v450
        %452 = vmatmul.f32.gmra.mxu0 %v224
        %v453 = vpop.f32.mrf.mxu0
        %v454 = vadd.f32 %v341, %v453
        %455 = vmatmul.f32.gmra.mxu0 %v225
        %v456 = vpop.f32.mrf.mxu0
        %v457 = vadd.f32 %v344, %v456
        %458 = vmatmul.f32.gmra.mxu0 %v226
        %v459 = vpop.f32.mrf.mxu0
        %v460 = vadd.f32 %v347, %v459
        %461 = vmatmul.f32.gmra.mxu0 %v227
        %v462 = vpop.f32.mrf.mxu0
        %v463 = vadd.f32 %v350, %v462
        %464 = vmatmul.f32.gmra.mxu0 %v228
        %v465 = vpop.f32.mrf.mxu0
        %v466 = vadd.f32 %v353, %v465
        %467 = vmatmul.f32.gmra.mxu0 %v229
        %v468 = vpop.f32.mrf.mxu0
        %v469 = vadd.f32 %v356, %v468
        %470 = vmatmul.f32.gmra.mxu0 %v230
        %v471 = vpop.f32.mrf.mxu0
        %v472 = vadd.f32 %v359, %v471
        %473 = vmatmul.f32.gmra.mxu0 %v231
        %v474 = vpop.f32.mrf.mxu0
        %v475 = vadd.f32 %v362, %v474
        %476 = vmatmul.f32.gmra.mxu0 %v232
        %v477 = vpop.f32.mrf.mxu0
        %v478 = vadd.f32 %v365, %v477
        %479 = vmatmul.f32.gmra.mxu0 %v233
        %v480 = vpop.f32.mrf.mxu0
        %v481 = vadd.f32 %v368, %v480
        %482 = vmatmul.f32.gmra.mxu0 %v234
        %v483 = vpop.f32.mrf.mxu0
        %v484 = vadd.f32 %v371, %v483
        %485 = vmatmul.f32.gmra.mxu0 %v235
        %v486 = vpop.f32.mrf.mxu0
        %v487 = vadd.f32 %v374, %v486
        %488 = vmatmul.f32.gmra.mxu0 %v236
        %v489 = vpop.f32.mrf.mxu0
        %v490 = vadd.f32 %v377, %v489
        %491 = vmatmul.f32.gmra.mxu0 %v237
        %v492 = vpop.f32.mrf.mxu0
        %v493 = vadd.f32 %v380, %v492
        %494 = vmatmul.f32.gmra.mxu0 %v238
        %v495 = vpop.f32.mrf.mxu0
        %v496 = vadd.f32 %v383, %v495
        %497 = vmatmul.f32.gmra.mxu0 %v239
        %v498 = vpop.f32.mrf.mxu0
        %v499 = vadd.f32 %v386, %v498
        %500 = vdwg.mxu0
        %v501 = vld [vmem:[%s179 + $0x20] sm:$0xff]
        %v502 = vld [vmem:[%s179 + $0x28] sm:$0xff]
        %v503 = vld [vmem:[%s179 + $0x30] sm:$0xff]
        %v504 = vld [vmem:[%s179 + $0x38] sm:$0xff]
        %v505 = vld [vmem:[%s179 + $0x40] sm:$0xff]
        %v506 = vld [vmem:[%s179 + $0x48] sm:$0xff]
        %v507 = vld [vmem:[%s179 + $0x50] sm:$0xff]
        %v508 = vld [vmem:[%s179 + $0x58] sm:$0xff]
        %v509 = vld [vmem:[%s179 + $0x60] sm:$0xff]
        %v510 = vld [vmem:[%s179 + $0x68] sm:$0xff]
        %v511 = vld [vmem:[%s179 + $0x70] sm:$0xff]
        %v512 = vld [vmem:[%s179 + $0x78] sm:$0xff]
        %v513 = vld [vmem:[%s179 + $0x80] sm:$0xff]
        %v514 = vld [vmem:[%s179 + $0x88] sm:$0xff]
        %v515 = vld [vmem:[%s179 + $0x90] sm:$0xff]
        %v516 = vld [vmem:[%s179 + $0x98] sm:$0xff]
        %v517 = vld [vmem:[%s179 + $0xa0] sm:$0xff]
        %v518 = vld [vmem:[%s179 + $0xa8] sm:$0xff]
        %v519 = vld [vmem:[%s179 + $0xb0] sm:$0xff]
        %v520 = vld [vmem:[%s179 + $0xb8] sm:$0xff]
        %v521 = vld [vmem:[%s179 + $0xc0] sm:$0xff]
        %v522 = vld [vmem:[%s179 + $0xc8] sm:$0xff]
        %v523 = vld [vmem:[%s179 + $0xd0] sm:$0xff]
        %v524 = vld [vmem:[%s179 + $0xd8] sm:$0xff]
        %v525 = vld [vmem:[%s179 + $0xe0] sm:$0xff]
        %v526 = vld [vmem:[%s179 + $0xe8] sm:$0xff]
        %v527 = vld [vmem:[%s179 + $0xf0] sm:$0xff]
        %v528 = vld [vmem:[%s179 + $0xf8] sm:$0xff]
        %v529 = vld [vmem:[%s179 + $0x100] sm:$0xff]
        %v530 = vld [vmem:[%s179 + $0x108] sm:$0xff]
        %v531 = vld [vmem:[%s179 + $0x110] sm:$0xff]
        %v532 = vld [vmem:[%s179 + $0x118] sm:$0xff]
        %s533 = scalar_lea.vmem [#allocation5], 256
        %v534 = vld [vmem:[%s533] sm:$0xff]
        %v535 = vld [vmem:[%s533 + $0x8] sm:$0xff]
        %v536 = vld [vmem:[%s533 + $0x10] sm:$0xff]
        %v537 = vld [vmem:[%s533 + $0x18] sm:$0xff]
        %v538 = vld [vmem:[%s533 + $0x20] sm:$0xff]
        %v539 = vld [vmem:[%s533 + $0x28] sm:$0xff]
        %v540 = vld [vmem:[%s533 + $0x30] sm:$0xff]
        %v541 = vld [vmem:[%s533 + $0x38] sm:$0xff]
        %v542 = vld [vmem:[%s533 + $0x40] sm:$0xff]
        %v543 = vld [vmem:[%s533 + $0x48] sm:$0xff]
        %v544 = vld [vmem:[%s533 + $0x50] sm:$0xff]
        %v545 = vld [vmem:[%s533 + $0x58] sm:$0xff]
        %v546 = vld [vmem:[%s533 + $0x60] sm:$0xff]
        %v547 = vld [vmem:[%s533 + $0x68] sm:$0xff]
        %v548 = vld [vmem:[%s533 + $0x70] sm:$0xff]
        %v549 = vld [vmem:[%s533 + $0x78] sm:$0xff]
        %550 = vmatpush.msra.mxu0 %v549
        %551 = vmatpush.msra.mxu0 %v548
        %552 = vmatpush.msra.mxu0 %v547
        %553 = vmatpush.msra.mxu0 %v546
        %554 = vmatpush.msra.mxu0 %v545
        %555 = vmatpush.msra.mxu0 %v544
        %556 = vmatpush.msra.mxu0 %v543
        %557 = vmatpush.msra.mxu0 %v542
        %558 = vmatpush.msra.mxu0 %v541
        %559 = vmatpush.msra.mxu0 %v540
        %560 = vmatpush.msra.mxu0 %v539
        %561 = vmatpush.msra.mxu0 %v538
        %562 = vmatpush.msra.mxu0 %v537
        %563 = vmatpush.msra.mxu0 %v536
        %564 = vmatpush.msra.mxu0 %v535
        %565 = vmatpush.msra.mxu0 %v534
        %566 = vmatmul.f32.gmra.mxu0 %v501
        %v567 = vpop.f32.mrf.mxu0
        %v568 = vadd.f32 0.0, %v567
        %569 = vmatmul.f32.gmra.mxu0 %v502
        %v570 = vpop.f32.mrf.mxu0
        %v571 = vadd.f32 0.0, %v570
        %572 = vmatmul.f32.gmra.mxu0 %v503
        %v573 = vpop.f32.mrf.mxu0
        %v574 = vadd.f32 0.0, %v573
        %575 = vmatmul.f32.gmra.mxu0 %v504
        %v576 = vpop.f32.mrf.mxu0
        %v577 = vadd.f32 0.0, %v576
        %578 = vmatmul.f32.gmra.mxu0 %v505
        %v579 = vpop.f32.mrf.mxu0
        %v580 = vadd.f32 0.0, %v579
        %581 = vmatmul.f32.gmra.mxu0 %v506
        %v582 = vpop.f32.mrf.mxu0
        %v583 = vadd.f32 0.0, %v582
        %584 = vmatmul.f32.gmra.mxu0 %v507
        %v585 = vpop.f32.mrf.mxu0
        %v586 = vadd.f32 0.0, %v585
        %587 = vmatmul.f32.gmra.mxu0 %v508
        %v588 = vpop.f32.mrf.mxu0
        %v589 = vadd.f32 0.0, %v588
        %590 = vmatmul.f32.gmra.mxu0 %v509
        %v591 = vpop.f32.mrf.mxu0
        %v592 = vadd.f32 0.0, %v591
        %593 = vmatmul.f32.gmra.mxu0 %v510
        %v594 = vpop.f32.mrf.mxu0
        %v595 = vadd.f32 0.0, %v594
        %596 = vmatmul.f32.gmra.mxu0 %v511
        %v597 = vpop.f32.mrf.mxu0
        %v598 = vadd.f32 0.0, %v597
        %599 = vmatmul.f32.gmra.mxu0 %v512
        %v600 = vpop.f32.mrf.mxu0
        %v601 = vadd.f32 0.0, %v600
        %602 = vmatmul.f32.gmra.mxu0 %v513
        %v603 = vpop.f32.mrf.mxu0
        %v604 = vadd.f32 0.0, %v603
        %605 = vmatmul.f32.gmra.mxu0 %v514
        %v606 = vpop.f32.mrf.mxu0
        %v607 = vadd.f32 0.0, %v606
        %608 = vmatmul.f32.gmra.mxu0 %v515
        %v609 = vpop.f32.mrf.mxu0
        %v610 = vadd.f32 0.0, %v609
        %611 = vmatmul.f32.gmra.mxu0 %v516
        %v612 = vpop.f32.mrf.mxu0
        %v613 = vadd.f32 0.0, %v612
        %614 = vmatmul.f32.gmra.mxu0 %v517
        %v615 = vpop.f32.mrf.mxu0
        %v616 = vadd.f32 0.0, %v615
        %617 = vmatmul.f32.gmra.mxu0 %v518
        %v618 = vpop.f32.mrf.mxu0
        %v619 = vadd.f32 0.0, %v618
        %620 = vmatmul.f32.gmra.mxu0 %v519
        %v621 = vpop.f32.mrf.mxu0
        %v622 = vadd.f32 0.0, %v621
        %623 = vmatmul.f32.gmra.mxu0 %v520
        %v624 = vpop.f32.mrf.mxu0
        %v625 = vadd.f32 0.0, %v624
        %626 = vmatmul.f32.gmra.mxu0 %v521
        %v627 = vpop.f32.mrf.mxu0
        %v628 = vadd.f32 0.0, %v627
        %629 = vmatmul.f32.gmra.mxu0 %v522
        %v630 = vpop.f32.mrf.mxu0
        %v631 = vadd.f32 0.0, %v630
        %632 = vmatmul.f32.gmra.mxu0 %v523
        %v633 = vpop.f32.mrf.mxu0
        %v634 = vadd.f32 0.0, %v633
        %635 = vmatmul.f32.gmra.mxu0 %v524
        %v636 = vpop.f32.mrf.mxu0
        %v637 = vadd.f32 0.0, %v636
        %638 = vmatmul.f32.gmra.mxu0 %v525
        %v639 = vpop.f32.mrf.mxu0
        %v640 = vadd.f32 0.0, %v639
        %641 = vmatmul.f32.gmra.mxu0 %v526
        %v642 = vpop.f32.mrf.mxu0
        %v643 = vadd.f32 0.0, %v642
        %644 = vmatmul.f32.gmra.mxu0 %v527
        %v645 = vpop.f32.mrf.mxu0
        %v646 = vadd.f32 0.0, %v645
        %647 = vmatmul.f32.gmra.mxu0 %v528
        %v648 = vpop.f32.mrf.mxu0
        %v649 = vadd.f32 0.0, %v648
        %650 = vmatmul.f32.gmra.mxu0 %v529
        %v651 = vpop.f32.mrf.mxu0
        %v652 = vadd.f32 0.0, %v651
        %653 = vmatmul.f32.gmra.mxu0 %v530
        %v654 = vpop.f32.mrf.mxu0
        %v655 = vadd.f32 0.0, %v654
        %656 = vmatmul.f32.gmra.mxu0 %v531
        %v657 = vpop.f32.mrf.mxu0
        %v658 = vadd.f32 0.0, %v657
        %659 = vmatmul.f32.gmra.mxu0 %v532
        %v660 = vpop.f32.mrf.mxu0
        %v661 = vadd.f32 0.0, %v660
        %662 = vdwg.mxu0
        %v663 = vadd.f32 %v406, %v568
        %v664 = vadd.f32 %v409, %v571
        %v665 = vadd.f32 %v412, %v574
        %v666 = vadd.f32 %v415, %v577
        %v667 = vadd.f32 %v418, %v580
        %v668 = vadd.f32 %v421, %v583
        %v669 = vadd.f32 %v424, %v586
        %v670 = vadd.f32 %v427, %v589
        %v671 = vadd.f32 %v430, %v592
        %v672 = vadd.f32 %v433, %v595
        %v673 = vadd.f32 %v436, %v598
        %v674 = vadd.f32 %v439, %v601
        %v675 = vadd.f32 %v442, %v604
        %v676 = vadd.f32 %v445, %v607
        %v677 = vadd.f32 %v448, %v610
        %v678 = vadd.f32 %v451, %v613
        %v679 = vadd.f32 %v454, %v616
        %v680 = vadd.f32 %v457, %v619
        %v681 = vadd.f32 %v460, %v622
        %v682 = vadd.f32 %v463, %v625
        %v683 = vadd.f32 %v466, %v628
        %v684 = vadd.f32 %v469, %v631
        %v685 = vadd.f32 %v472, %v634
        %v686 = vadd.f32 %v475, %v637
        %v687 = vadd.f32 %v478, %v640
        %v688 = vadd.f32 %v481, %v643
        %v689 = vadd.f32 %v484, %v646
        %v690 = vadd.f32 %v487, %v649
        %v691 = vadd.f32 %v490, %v652
        %v692 = vadd.f32 %v493, %v655
        %v693 = vadd.f32 %v496, %v658
        %v694 = vadd.f32 %v499, %v661
        %v695 = vld [vmem:[%s179 + $0x30] sm:$0xff]
        %v696 = vld [vmem:[%s179 + $0x38] sm:$0xff]
        %v697 = vld [vmem:[%s179 + $0x40] sm:$0xff]
        %v698 = vld [vmem:[%s179 + $0x48] sm:$0xff]
        %v699 = vld [vmem:[%s179 + $0x50] sm:$0xff]
        %v700 = vld [vmem:[%s179 + $0x58] sm:$0xff]
        %v701 = vld [vmem:[%s179 + $0x60] sm:$0xff]
        %v702 = vld [vmem:[%s179 + $0x68] sm:$0xff]
        %v703 = vld [vmem:[%s179 + $0x70] sm:$0xff]
        %v704 = vld [vmem:[%s179 + $0x78] sm:$0xff]
        %v705 = vld [vmem:[%s179 + $0x80] sm:$0xff]
        %v706 = vld [vmem:[%s179 + $0x88] sm:$0xff]
        %v707 = vld [vmem:[%s179 + $0x90] sm:$0xff]
        %v708 = vld [vmem:[%s179 + $0x98] sm:$0xff]
        %v709 = vld [vmem:[%s179 + $0xa0] sm:$0xff]
        %v710 = vld [vmem:[%s179 + $0xa8] sm:$0xff]
        %v711 = vld [vmem:[%s179 + $0xb0] sm:$0xff]
        %v712 = vld [vmem:[%s179 + $0xb8] sm:$0xff]
        %v713 = vld [vmem:[%s179 + $0xc0] sm:$0xff]
        %v714 = vld [vmem:[%s179 + $0xc8] sm:$0xff]
        %v715 = vld [vmem:[%s179 + $0xd0] sm:$0xff]
        %v716 = vld [vmem:[%s179 + $0xd8] sm:$0xff]
        %v717 = vld [vmem:[%s179 + $0xe0] sm:$0xff]
        %v718 = vld [vmem:[%s179 + $0xe8] sm:$0xff]
        %v719 = vld [vmem:[%s179 + $0xf0] sm:$0xff]
        %v720 = vld [vmem:[%s179 + $0xf8] sm:$0xff]
        %v721 = vld [vmem:[%s179 + $0x100] sm:$0xff]
        %v722 = vld [vmem:[%s179 + $0x108] sm:$0xff]
        %v723 = vld [vmem:[%s179 + $0x110] sm:$0xff]
        %v724 = vld [vmem:[%s179 + $0x118] sm:$0xff]
        %v725 = vld [vmem:[%s179 + $0x120] sm:$0xff]
        %v726 = vld [vmem:[%s179 + $0x128] sm:$0xff]
        %s727 = scalar_lea.vmem [#allocation5], 384
        %v728 = vld [vmem:[%s727] sm:$0xff]
        %v729 = vld [vmem:[%s727 + $0x8] sm:$0xff]
        %v730 = vld [vmem:[%s727 + $0x10] sm:$0xff]
        %v731 = vld [vmem:[%s727 + $0x18] sm:$0xff]
        %v732 = vld [vmem:[%s727 + $0x20] sm:$0xff]
        %v733 = vld [vmem:[%s727 + $0x28] sm:$0xff]
        %v734 = vld [vmem:[%s727 + $0x30] sm:$0xff]
        %v735 = vld [vmem:[%s727 + $0x38] sm:$0xff]
        %v736 = vld [vmem:[%s727 + $0x40] sm:$0xff]
        %v737 = vld [vmem:[%s727 + $0x48] sm:$0xff]
        %v738 = vld [vmem:[%s727 + $0x50] sm:$0xff]
        %v739 = vld [vmem:[%s727 + $0x58] sm:$0xff]
        %v740 = vld [vmem:[%s727 + $0x60] sm:$0xff]
        %v741 = vld [vmem:[%s727 + $0x68] sm:$0xff]
        %v742 = vld [vmem:[%s727 + $0x70] sm:$0xff]
        %v743 = vld [vmem:[%s727 + $0x78] sm:$0xff]
        %744 = vmatpush.msra.mxu0 %v743
        %745 = vmatpush.msra.mxu0 %v742
        %746 = vmatpush.msra.mxu0 %v741
        %747 = vmatpush.msra.mxu0 %v740
        %748 = vmatpush.msra.mxu0 %v739
        %749 = vmatpush.msra.mxu0 %v738
        %750 = vmatpush.msra.mxu0 %v737
        %751 = vmatpush.msra.mxu0 %v736
        %752 = vmatpush.msra.mxu0 %v735
        %753 = vmatpush.msra.mxu0 %v734
        %754 = vmatpush.msra.mxu0 %v733
        %755 = vmatpush.msra.mxu0 %v732
        %756 = vmatpush.msra.mxu0 %v731
        %757 = vmatpush.msra.mxu0 %v730
        %758 = vmatpush.msra.mxu0 %v729
        %759 = vmatpush.msra.mxu0 %v728
        %760 = vmatmul.f32.gmra.mxu0 %v695
        %v761 = vpop.f32.mrf.mxu0
        %v762 = vadd.f32 0.0, %v761
        %763 = vmatmul.f32.gmra.mxu0 %v696
        %v764 = vpop.f32.mrf.mxu0
        %v765 = vadd.f32 0.0, %v764
        %766 = vmatmul.f32.gmra.mxu0 %v697
        %v767 = vpop.f32.mrf.mxu0
        %v768 = vadd.f32 0.0, %v767
        %769 = vmatmul.f32.gmra.mxu0 %v698
        %v770 = vpop.f32.mrf.mxu0
        %v771 = vadd.f32 0.0, %v770
        %772 = vmatmul.f32.gmra.mxu0 %v699
        %v773 = vpop.f32.mrf.mxu0
        %v774 = vadd.f32 0.0, %v773
        %775 = vmatmul.f32.gmra.mxu0 %v700
        %v776 = vpop.f32.mrf.mxu0
        %v777 = vadd.f32 0.0, %v776
        %778 = vmatmul.f32.gmra.mxu0 %v701
        %v779 = vpop.f32.mrf.mxu0
        %v780 = vadd.f32 0.0, %v779
        %781 = vmatmul.f32.gmra.mxu0 %v702
        %v782 = vpop.f32.mrf.mxu0
        %v783 = vadd.f32 0.0, %v782
        %784 = vmatmul.f32.gmra.mxu0 %v703
        %v785 = vpop.f32.mrf.mxu0
        %v786 = vadd.f32 0.0, %v785
        %787 = vmatmul.f32.gmra.mxu0 %v704
        %v788 = vpop.f32.mrf.mxu0
        %v789 = vadd.f32 0.0, %v788
        %790 = vmatmul.f32.gmra.mxu0 %v705
        %v791 = vpop.f32.mrf.mxu0
        %v792 = vadd.f32 0.0, %v791
        %793 = vmatmul.f32.gmra.mxu0 %v706
        %v794 = vpop.f32.mrf.mxu0
        %v795 = vadd.f32 0.0, %v794
        %796 = vmatmul.f32.gmra.mxu0 %v707
        %v797 = vpop.f32.mrf.mxu0
        %v798 = vadd.f32 0.0, %v797
        %799 = vmatmul.f32.gmra.mxu0 %v708
        %v800 = vpop.f32.mrf.mxu0
        %v801 = vadd.f32 0.0, %v800
        %802 = vmatmul.f32.gmra.mxu0 %v709
        %v803 = vpop.f32.mrf.mxu0
        %v804 = vadd.f32 0.0, %v803
        %805 = vmatmul.f32.gmra.mxu0 %v710
        %v806 = vpop.f32.mrf.mxu0
        %v807 = vadd.f32 0.0, %v806
        %808 = vmatmul.f32.gmra.mxu0 %v711
        %v809 = vpop.f32.mrf.mxu0
        %v810 = vadd.f32 0.0, %v809
        %811 = vmatmul.f32.gmra.mxu0 %v712
        %v812 = vpop.f32.mrf.mxu0
        %v813 = vadd.f32 0.0, %v812
        %814 = vmatmul.f32.gmra.mxu0 %v713
        %v815 = vpop.f32.mrf.mxu0
        %v816 = vadd.f32 0.0, %v815
        %817 = vmatmul.f32.gmra.mxu0 %v714
        %v818 = vpop.f32.mrf.mxu0
        %v819 = vadd.f32 0.0, %v818
        %820 = vmatmul.f32.gmra.mxu0 %v715
        %v821 = vpop.f32.mrf.mxu0
        %v822 = vadd.f32 0.0, %v821
        %823 = vmatmul.f32.gmra.mxu0 %v716
        %v824 = vpop.f32.mrf.mxu0
        %v825 = vadd.f32 0.0, %v824
        %826 = vmatmul.f32.gmra.mxu0 %v717
        %v827 = vpop.f32.mrf.mxu0
        %v828 = vadd.f32 0.0, %v827
        %829 = vmatmul.f32.gmra.mxu0 %v718
        %v830 = vpop.f32.mrf.mxu0
        %v831 = vadd.f32 0.0, %v830
        %832 = vmatmul.f32.gmra.mxu0 %v719
        %v833 = vpop.f32.mrf.mxu0
        %v834 = vadd.f32 0.0, %v833
        %835 = vmatmul.f32.gmra.mxu0 %v720
        %v836 = vpop.f32.mrf.mxu0
        %v837 = vadd.f32 0.0, %v836
        %838 = vmatmul.f32.gmra.mxu0 %v721
        %v839 = vpop.f32.mrf.mxu0
        %v840 = vadd.f32 0.0, %v839
        %841 = vmatmul.f32.gmra.mxu0 %v722
        %v842 = vpop.f32.mrf.mxu0
        %v843 = vadd.f32 0.0, %v842
        %844 = vmatmul.f32.gmra.mxu0 %v723
        %v845 = vpop.f32.mrf.mxu0
        %v846 = vadd.f32 0.0, %v845
        %847 = vmatmul.f32.gmra.mxu0 %v724
        %v848 = vpop.f32.mrf.mxu0
        %v849 = vadd.f32 0.0, %v848
        %850 = vmatmul.f32.gmra.mxu0 %v725
        %v851 = vpop.f32.mrf.mxu0
        %v852 = vadd.f32 0.0, %v851
        %853 = vmatmul.f32.gmra.mxu0 %v726
        %v854 = vpop.f32.mrf.mxu0
        %v855 = vadd.f32 0.0, %v854
        %856 = vdwg.mxu0
        %v857 = vadd.f32 %v663, %v762
        %v858 = vadd.f32 %v664, %v765
        %v859 = vadd.f32 %v665, %v768
        %v860 = vadd.f32 %v666, %v771
        %v861 = vadd.f32 %v667, %v774
        %v862 = vadd.f32 %v668, %v777
        %v863 = vadd.f32 %v669, %v780
        %v864 = vadd.f32 %v670, %v783
        %v865 = vadd.f32 %v671, %v786
        %v866 = vadd.f32 %v672, %v789
        %v867 = vadd.f32 %v673, %v792
        %v868 = vadd.f32 %v674, %v795
        %v869 = vadd.f32 %v675, %v798
        %v870 = vadd.f32 %v676, %v801
        %v871 = vadd.f32 %v677, %v804
        %v872 = vadd.f32 %v678, %v807
        %v873 = vadd.f32 %v679, %v810
        %v874 = vadd.f32 %v680, %v813
        %v875 = vadd.f32 %v681, %v816
        %v876 = vadd.f32 %v682, %v819
        %v877 = vadd.f32 %v683, %v822
        %v878 = vadd.f32 %v684, %v825
        %v879 = vadd.f32 %v685, %v828
        %v880 = vadd.f32 %v686, %v831
        %v881 = vadd.f32 %v687, %v834
        %v882 = vadd.f32 %v688, %v837
        %v883 = vadd.f32 %v689, %v840
        %v884 = vadd.f32 %v690, %v843
        %v885 = vadd.f32 %v691, %v846
        %v886 = vadd.f32 %v692, %v849
        %v887 = vadd.f32 %v693, %v852
        %v888 = vadd.f32 %v694, %v855
        %v889 = vld [vmem:[%s179 + $0x40] sm:$0xff]
        %v890 = vld [vmem:[%s179 + $0x48] sm:$0xff]
        %v891 = vld [vmem:[%s179 + $0x50] sm:$0xff]
        %v892 = vld [vmem:[%s179 + $0x58] sm:$0xff]
        %v893 = vld [vmem:[%s179 + $0x60] sm:$0xff]
        %v894 = vld [vmem:[%s179 + $0x68] sm:$0xff]
        %v895 = vld [vmem:[%s179 + $0x70] sm:$0xff]
        %v896 = vld [vmem:[%s179 + $0x78] sm:$0xff]
        %v897 = vld [vmem:[%s179 + $0x80] sm:$0xff]
        %v898 = vld [vmem:[%s179 + $0x88] sm:$0xff]
        %v899 = vld [vmem:[%s179 + $0x90] sm:$0xff]
        %v900 = vld [vmem:[%s179 + $0x98] sm:$0xff]
        %v901 = vld [vmem:[%s179 + $0xa0] sm:$0xff]
        %v902 = vld [vmem:[%s179 + $0xa8] sm:$0xff]
        %v903 = vld [vmem:[%s179 + $0xb0] sm:$0xff]
        %v904 = vld [vmem:[%s179 + $0xb8] sm:$0xff]
        %v905 = vld [vmem:[%s179 + $0xc0] sm:$0xff]
        %v906 = vld [vmem:[%s179 + $0xc8] sm:$0xff]
        %v907 = vld [vmem:[%s179 + $0xd0] sm:$0xff]
        %v908 = vld [vmem:[%s179 + $0xd8] sm:$0xff]
        %v909 = vld [vmem:[%s179 + $0xe0] sm:$0xff]
        %v910 = vld [vmem:[%s179 + $0xe8] sm:$0xff]
        %v911 = vld [vmem:[%s179 + $0xf0] sm:$0xff]
        %v912 = vld [vmem:[%s179 + $0xf8] sm:$0xff]
        %v913 = vld [vmem:[%s179 + $0x100] sm:$0xff]
        %v914 = vld [vmem:[%s179 + $0x108] sm:$0xff]
        %v915 = vld [vmem:[%s179 + $0x110] sm:$0xff]
        %v916 = vld [vmem:[%s179 + $0x118] sm:$0xff]
        %v917 = vld [vmem:[%s179 + $0x120] sm:$0xff]
        %v918 = vld [vmem:[%s179 + $0x128] sm:$0xff]
        %v919 = vld [vmem:[%s179 + $0x130] sm:$0xff]
        %v920 = vld [vmem:[%s179 + $0x138] sm:$0xff]
        %s921 = scalar_lea.vmem [#allocation5], 512
        %v922 = vld [vmem:[%s921] sm:$0xff]
        %v923 = vld [vmem:[%s921 + $0x8] sm:$0xff]
        %v924 = vld [vmem:[%s921 + $0x10] sm:$0xff]
        %v925 = vld [vmem:[%s921 + $0x18] sm:$0xff]
        %v926 = vld [vmem:[%s921 + $0x20] sm:$0xff]
        %v927 = vld [vmem:[%s921 + $0x28] sm:$0xff]
        %v928 = vld [vmem:[%s921 + $0x30] sm:$0xff]
        %v929 = vld [vmem:[%s921 + $0x38] sm:$0xff]
        %v930 = vld [vmem:[%s921 + $0x40] sm:$0xff]
        %v931 = vld [vmem:[%s921 + $0x48] sm:$0xff]
        %v932 = vld [vmem:[%s921 + $0x50] sm:$0xff]
        %v933 = vld [vmem:[%s921 + $0x58] sm:$0xff]
        %v934 = vld [vmem:[%s921 + $0x60] sm:$0xff]
        %v935 = vld [vmem:[%s921 + $0x68] sm:$0xff]
        %v936 = vld [vmem:[%s921 + $0x70] sm:$0xff]
        %v937 = vld [vmem:[%s921 + $0x78] sm:$0xff]
        %938 = vmatpush.msra.mxu0 %v937
        %939 = vmatpush.msra.mxu0 %v936
        %940 = vmatpush.msra.mxu0 %v935
        %941 = vmatpush.msra.mxu0 %v934
        %942 = vmatpush.msra.mxu0 %v933
        %943 = vmatpush.msra.mxu0 %v932
        %944 = vmatpush.msra.mxu0 %v931
        %945 = vmatpush.msra.mxu0 %v930
        %946 = vmatpush.msra.mxu0 %v929
        %947 = vmatpush.msra.mxu0 %v928
        %948 = vmatpush.msra.mxu0 %v927
        %949 = vmatpush.msra.mxu0 %v926
        %950 = vmatpush.msra.mxu0 %v925
        %951 = vmatpush.msra.mxu0 %v924
        %952 = vmatpush.msra.mxu0 %v923
        %953 = vmatpush.msra.mxu0 %v922
        %954 = vmatmul.f32.gmra.mxu0 %v889
        %v955 = vpop.f32.mrf.mxu0
        %v956 = vadd.f32 0.0, %v955
        %957 = vmatmul.f32.gmra.mxu0 %v890
        %v958 = vpop.f32.mrf.mxu0
        %v959 = vadd.f32 0.0, %v958
        %960 = vmatmul.f32.gmra.mxu0 %v891
        %v961 = vpop.f32.mrf.mxu0
        %v962 = vadd.f32 0.0, %v961
        %963 = vmatmul.f32.gmra.mxu0 %v892
        %v964 = vpop.f32.mrf.mxu0
        %v965 = vadd.f32 0.0, %v964
        %966 = vmatmul.f32.gmra.mxu0 %v893
        %v967 = vpop.f32.mrf.mxu0
        %v968 = vadd.f32 0.0, %v967
        %969 = vmatmul.f32.gmra.mxu0 %v894
        %v970 = vpop.f32.mrf.mxu0
        %v971 = vadd.f32 0.0, %v970
        %972 = vmatmul.f32.gmra.mxu0 %v895
        %v973 = vpop.f32.mrf.mxu0
        %v974 = vadd.f32 0.0, %v973
        %975 = vmatmul.f32.gmra.mxu0 %v896
        %v976 = vpop.f32.mrf.mxu0
        %v977 = vadd.f32 0.0, %v976
        %978 = vmatmul.f32.gmra.mxu0 %v897
        %v979 = vpop.f32.mrf.mxu0
        %v980 = vadd.f32 0.0, %v979
        %981 = vmatmul.f32.gmra.mxu0 %v898
        %v982 = vpop.f32.mrf.mxu0
        %v983 = vadd.f32 0.0, %v982
        %984 = vmatmul.f32.gmra.mxu0 %v899
        %v985 = vpop.f32.mrf.mxu0
        %v986 = vadd.f32 0.0, %v985
        %987 = vmatmul.f32.gmra.mxu0 %v900
        %v988 = vpop.f32.mrf.mxu0
        %v989 = vadd.f32 0.0, %v988
        %990 = vmatmul.f32.gmra.mxu0 %v901
        %v991 = vpop.f32.mrf.mxu0
        %v992 = vadd.f32 0.0, %v991
        %993 = vmatmul.f32.gmra.mxu0 %v902
        %v994 = vpop.f32.mrf.mxu0
        %v995 = vadd.f32 0.0, %v994
        %996 = vmatmul.f32.gmra.mxu0 %v903
        %v997 = vpop.f32.mrf.mxu0
        %v998 = vadd.f32 0.0, %v997
        %999 = vmatmul.f32.gmra.mxu0 %v904
        %v1000 = vpop.f32.mrf.mxu0
        %v1001 = vadd.f32 0.0, %v1000
        %1002 = vmatmul.f32.gmra.mxu0 %v905
        %v1003 = vpop.f32.mrf.mxu0
        %v1004 = vadd.f32 0.0, %v1003
        %1005 = vmatmul.f32.gmra.mxu0 %v906
        %v1006 = vpop.f32.mrf.mxu0
        %v1007 = vadd.f32 0.0, %v1006
        %1008 = vmatmul.f32.gmra.mxu0 %v907
        %v1009 = vpop.f32.mrf.mxu0
        %v1010 = vadd.f32 0.0, %v1009
        %1011 = vmatmul.f32.gmra.mxu0 %v908
        %v1012 = vpop.f32.mrf.mxu0
        %v1013 = vadd.f32 0.0, %v1012
        %1014 = vmatmul.f32.gmra.mxu0 %v909
        %v1015 = vpop.f32.mrf.mxu0
        %v1016 = vadd.f32 0.0, %v1015
        %1017 = vmatmul.f32.gmra.mxu0 %v910
        %v1018 = vpop.f32.mrf.mxu0
        %v1019 = vadd.f32 0.0, %v1018
        %1020 = vmatmul.f32.gmra.mxu0 %v911
        %v1021 = vpop.f32.mrf.mxu0
        %v1022 = vadd.f32 0.0, %v1021
        %1023 = vmatmul.f32.gmra.mxu0 %v912
        %v1024 = vpop.f32.mrf.mxu0
        %v1025 = vadd.f32 0.0, %v1024
        %1026 = vmatmul.f32.gmra.mxu0 %v913
        %v1027 = vpop.f32.mrf.mxu0
        %v1028 = vadd.f32 0.0, %v1027
        %1029 = vmatmul.f32.gmra.mxu0 %v914
        %v1030 = vpop.f32.mrf.mxu0
        %v1031 = vadd.f32 0.0, %v1030
        %1032 = vmatmul.f32.gmra.mxu0 %v915
        %v1033 = vpop.f32.mrf.mxu0
        %v1034 = vadd.f32 0.0, %v1033
        %1035 = vmatmul.f32.gmra.mxu0 %v916
        %v1036 = vpop.f32.mrf.mxu0
        %v1037 = vadd.f32 0.0, %v1036
        %1038 = vmatmul.f32.gmra.mxu0 %v917
        %v1039 = vpop.f32.mrf.mxu0
        %v1040 = vadd.f32 0.0, %v1039
        %1041 = vmatmul.f32.gmra.mxu0 %v918
        %v1042 = vpop.f32.mrf.mxu0
        %v1043 = vadd.f32 0.0, %v1042
        %1044 = vmatmul.f32.gmra.mxu0 %v919
        %v1045 = vpop.f32.mrf.mxu0
        %v1046 = vadd.f32 0.0, %v1045
        %1047 = vmatmul.f32.gmra.mxu0 %v920
        %v1048 = vpop.f32.mrf.mxu0
        %v1049 = vadd.f32 0.0, %v1048
        %1050 = vdwg.mxu0
        %v1051 = vadd.f32 %v857, %v956
        %v1052 = vadd.f32 %v858, %v959
        %v1053 = vadd.f32 %v859, %v962
        %v1054 = vadd.f32 %v860, %v965
        %v1055 = vadd.f32 %v861, %v968
        %v1056 = vadd.f32 %v862, %v971
        %v1057 = vadd.f32 %v863, %v974
        %v1058 = vadd.f32 %v864, %v977
        %v1059 = vadd.f32 %v865, %v980
        %v1060 = vadd.f32 %v866, %v983
        %v1061 = vadd.f32 %v867, %v986
        %v1062 = vadd.f32 %v868, %v989
        %v1063 = vadd.f32 %v869, %v992
        %v1064 = vadd.f32 %v870, %v995
        %v1065 = vadd.f32 %v871, %v998
        %v1066 = vadd.f32 %v872, %v1001
        %v1067 = vadd.f32 %v873, %v1004
        %v1068 = vadd.f32 %v874, %v1007
        %v1069 = vadd.f32 %v875, %v1010
        %v1070 = vadd.f32 %v876, %v1013
        %v1071 = vadd.f32 %v877, %v1016
        %v1072 = vadd.f32 %v878, %v1019
        %v1073 = vadd.f32 %v879, %v1022
        %v1074 = vadd.f32 %v880, %v1025
        %v1075 = vadd.f32 %v881, %v1028
        %v1076 = vadd.f32 %v882, %v1031
        %v1077 = vadd.f32 %v883, %v1034
        %v1078 = vadd.f32 %v884, %v1037
        %v1079 = vadd.f32 %v885, %v1040
        %v1080 = vadd.f32 %v886, %v1043
        %v1081 = vadd.f32 %v887, %v1046
        %v1082 = vadd.f32 %v888, %v1049
        %v1083 = vld [vmem:[%s179 + $0x50] sm:$0xff]
        %v1084 = vld [vmem:[%s179 + $0x58] sm:$0xff]
        %v1085 = vld [vmem:[%s179 + $0x60] sm:$0xff]
        %v1086 = vld [vmem:[%s179 + $0x68] sm:$0xff]
        %v1087 = vld [vmem:[%s179 + $0x70] sm:$0xff]
        %v1088 = vld [vmem:[%s179 + $0x78] sm:$0xff]
        %v1089 = vld [vmem:[%s179 + $0x80] sm:$0xff]
        %v1090 = vld [vmem:[%s179 + $0x88] sm:$0xff]
        %v1091 = vld [vmem:[%s179 + $0x90] sm:$0xff]
        %v1092 = vld [vmem:[%s179 + $0x98] sm:$0xff]
        %v1093 = vld [vmem:[%s179 + $0xa0] sm:$0xff]
        %v1094 = vld [vmem:[%s179 + $0xa8] sm:$0xff]
        %v1095 = vld [vmem:[%s179 + $0xb0] sm:$0xff]
        %v1096 = vld [vmem:[%s179 + $0xb8] sm:$0xff]
        %v1097 = vld [vmem:[%s179 + $0xc0] sm:$0xff]
        %v1098 = vld [vmem:[%s179 + $0xc8] sm:$0xff]
        %v1099 = vld [vmem:[%s179 + $0xd0] sm:$0xff]
        %v1100 = vld [vmem:[%s179 + $0xd8] sm:$0xff]
        %v1101 = vld [vmem:[%s179 + $0xe0] sm:$0xff]
        %v1102 = vld [vmem:[%s179 + $0xe8] sm:$0xff]
        %v1103 = vld [vmem:[%s179 + $0xf0] sm:$0xff]
        %v1104 = vld [vmem:[%s179 + $0xf8] sm:$0xff]
        %v1105 = vld [vmem:[%s179 + $0x100] sm:$0xff]
        %v1106 = vld [vmem:[%s179 + $0x108] sm:$0xff]
        %v1107 = vld [vmem:[%s179 + $0x110] sm:$0xff]
        %v1108 = vld [vmem:[%s179 + $0x118] sm:$0xff]
        %v1109 = vld [vmem:[%s179 + $0x120] sm:$0xff]
        %v1110 = vld [vmem:[%s179 + $0x128] sm:$0xff]
        %v1111 = vld [vmem:[%s179 + $0x130] sm:$0xff]
        %v1112 = vld [vmem:[%s179 + $0x138] sm:$0xff]
        %v1113 = vld [vmem:[%s179 + $0x140] sm:$0xff]
        %v1114 = vld [vmem:[%s179 + $0x148] sm:$0xff]
        %s1115 = scalar_lea.vmem [#allocation5], 640
        %v1116 = vld [vmem:[%s1115] sm:$0xff]
        %v1117 = vld [vmem:[%s1115 + $0x8] sm:$0xff]
        %v1118 = vld [vmem:[%s1115 + $0x10] sm:$0xff]
        %v1119 = vld [vmem:[%s1115 + $0x18] sm:$0xff]
        %v1120 = vld [vmem:[%s1115 + $0x20] sm:$0xff]
        %v1121 = vld [vmem:[%s1115 + $0x28] sm:$0xff]
        %v1122 = vld [vmem:[%s1115 + $0x30] sm:$0xff]
        %v1123 = vld [vmem:[%s1115 + $0x38] sm:$0xff]
        %v1124 = vld [vmem:[%s1115 + $0x40] sm:$0xff]
        %v1125 = vld [vmem:[%s1115 + $0x48] sm:$0xff]
        %v1126 = vld [vmem:[%s1115 + $0x50] sm:$0xff]
        %v1127 = vld [vmem:[%s1115 + $0x58] sm:$0xff]
        %v1128 = vld [vmem:[%s1115 + $0x60] sm:$0xff]
        %v1129 = vld [vmem:[%s1115 + $0x68] sm:$0xff]
        %v1130 = vld [vmem:[%s1115 + $0x70] sm:$0xff]
        %v1131 = vld [vmem:[%s1115 + $0x78] sm:$0xff]
        %1132 = vmatpush.msra.mxu0 %v1131
        %1133 = vmatpush.msra.mxu0 %v1130
        %1134 = vmatpush.msra.mxu0 %v1129
        %1135 = vmatpush.msra.mxu0 %v1128
        %1136 = vmatpush.msra.mxu0 %v1127
        %1137 = vmatpush.msra.mxu0 %v1126
        %1138 = vmatpush.msra.mxu0 %v1125
        %1139 = vmatpush.msra.mxu0 %v1124
        %1140 = vmatpush.msra.mxu0 %v1123
        %1141 = vmatpush.msra.mxu0 %v1122
        %1142 = vmatpush.msra.mxu0 %v1121
        %1143 = vmatpush.msra.mxu0 %v1120
        %1144 = vmatpush.msra.mxu0 %v1119
        %1145 = vmatpush.msra.mxu0 %v1118
        %1146 = vmatpush.msra.mxu0 %v1117
        %1147 = vmatpush.msra.mxu0 %v1116
        %1148 = vmatmul.f32.gmra.mxu0 %v1083
        %v1149 = vpop.f32.mrf.mxu0
        %v1150 = vadd.f32 0.0, %v1149
        %1151 = vmatmul.f32.gmra.mxu0 %v1084
        %v1152 = vpop.f32.mrf.mxu0
        %v1153 = vadd.f32 0.0, %v1152
        %1154 = vmatmul.f32.gmra.mxu0 %v1085
        %v1155 = vpop.f32.mrf.mxu0
        %v1156 = vadd.f32 0.0, %v1155
        %1157 = vmatmul.f32.gmra.mxu0 %v1086
        %v1158 = vpop.f32.mrf.mxu0
        %v1159 = vadd.f32 0.0, %v1158
        %1160 = vmatmul.f32.gmra.mxu0 %v1087
        %v1161 = vpop.f32.mrf.mxu0
        %v1162 = vadd.f32 0.0, %v1161
        %1163 = vmatmul.f32.gmra.mxu0 %v1088
        %v1164 = vpop.f32.mrf.mxu0
        %v1165 = vadd.f32 0.0, %v1164
        %1166 = vmatmul.f32.gmra.mxu0 %v1089
        %v1167 = vpop.f32.mrf.mxu0
        %v1168 = vadd.f32 0.0, %v1167
        %1169 = vmatmul.f32.gmra.mxu0 %v1090
        %v1170 = vpop.f32.mrf.mxu0
        %v1171 = vadd.f32 0.0, %v1170
        %1172 = vmatmul.f32.gmra.mxu0 %v1091
        %v1173 = vpop.f32.mrf.mxu0
        %v1174 = vadd.f32 0.0, %v1173
        %1175 = vmatmul.f32.gmra.mxu0 %v1092
        %v1176 = vpop.f32.mrf.mxu0
        %v1177 = vadd.f32 0.0, %v1176
        %1178 = vmatmul.f32.gmra.mxu0 %v1093
        %v1179 = vpop.f32.mrf.mxu0
        %v1180 = vadd.f32 0.0, %v1179
        %1181 = vmatmul.f32.gmra.mxu0 %v1094
        %v1182 = vpop.f32.mrf.mxu0
        %v1183 = vadd.f32 0.0, %v1182
        %1184 = vmatmul.f32.gmra.mxu0 %v1095
        %v1185 = vpop.f32.mrf.mxu0
        %v1186 = vadd.f32 0.0, %v1185
        %1187 = vmatmul.f32.gmra.mxu0 %v1096
        %v1188 = vpop.f32.mrf.mxu0
        %v1189 = vadd.f32 0.0, %v1188
        %1190 = vmatmul.f32.gmra.mxu0 %v1097
        %v1191 = vpop.f32.mrf.mxu0
        %v1192 = vadd.f32 0.0, %v1191
        %1193 = vmatmul.f32.gmra.mxu0 %v1098
        %v1194 = vpop.f32.mrf.mxu0
        %v1195 = vadd.f32 0.0, %v1194
        %1196 = vmatmul.f32.gmra.mxu0 %v1099
        %v1197 = vpop.f32.mrf.mxu0
        %v1198 = vadd.f32 0.0, %v1197
        %1199 = vmatmul.f32.gmra.mxu0 %v1100
        %v1200 = vpop.f32.mrf.mxu0
        %v1201 = vadd.f32 0.0, %v1200
        %1202 = vmatmul.f32.gmra.mxu0 %v1101
        %v1203 = vpop.f32.mrf.mxu0
        %v1204 = vadd.f32 0.0, %v1203
        %1205 = vmatmul.f32.gmra.mxu0 %v1102
        %v1206 = vpop.f32.mrf.mxu0
        %v1207 = vadd.f32 0.0, %v1206
        %1208 = vmatmul.f32.gmra.mxu0 %v1103
        %v1209 = vpop.f32.mrf.mxu0
        %v1210 = vadd.f32 0.0, %v1209
        %1211 = vmatmul.f32.gmra.mxu0 %v1104
        %v1212 = vpop.f32.mrf.mxu0
        %v1213 = vadd.f32 0.0, %v1212
        %1214 = vmatmul.f32.gmra.mxu0 %v1105
        %v1215 = vpop.f32.mrf.mxu0
        %v1216 = vadd.f32 0.0, %v1215
        %1217 = vmatmul.f32.gmra.mxu0 %v1106
        %v1218 = vpop.f32.mrf.mxu0
        %v1219 = vadd.f32 0.0, %v1218
        %1220 = vmatmul.f32.gmra.mxu0 %v1107
        %v1221 = vpop.f32.mrf.mxu0
        %v1222 = vadd.f32 0.0, %v1221
        %1223 = vmatmul.f32.gmra.mxu0 %v1108
        %v1224 = vpop.f32.mrf.mxu0
        %v1225 = vadd.f32 0.0, %v1224
        %1226 = vmatmul.f32.gmra.mxu0 %v1109
        %v1227 = vpop.f32.mrf.mxu0
        %v1228 = vadd.f32 0.0, %v1227
        %1229 = vmatmul.f32.gmra.mxu0 %v1110
        %v1230 = vpop.f32.mrf.mxu0
        %v1231 = vadd.f32 0.0, %v1230
        %1232 = vmatmul.f32.gmra.mxu0 %v1111
        %v1233 = vpop.f32.mrf.mxu0
        %v1234 = vadd.f32 0.0, %v1233
        %1235 = vmatmul.f32.gmra.mxu0 %v1112
        %v1236 = vpop.f32.mrf.mxu0
        %v1237 = vadd.f32 0.0, %v1236
        %1238 = vmatmul.f32.gmra.mxu0 %v1113
        %v1239 = vpop.f32.mrf.mxu0
        %v1240 = vadd.f32 0.0, %v1239
        %1241 = vmatmul.f32.gmra.mxu0 %v1114
        %v1242 = vpop.f32.mrf.mxu0
        %v1243 = vadd.f32 0.0, %v1242
        %1244 = vdwg.mxu0
        %v1245 = vadd.f32 %v1051, %v1150
        %v1246 = vadd.f32 %v1052, %v1153
        %v1247 = vadd.f32 %v1053, %v1156
        %v1248 = vadd.f32 %v1054, %v1159
        %v1249 = vadd.f32 %v1055, %v1162
        %v1250 = vadd.f32 %v1056, %v1165
        %v1251 = vadd.f32 %v1057, %v1168
        %v1252 = vadd.f32 %v1058, %v1171
        %v1253 = vadd.f32 %v1059, %v1174
        %v1254 = vadd.f32 %v1060, %v1177
        %v1255 = vadd.f32 %v1061, %v1180
        %v1256 = vadd.f32 %v1062, %v1183
        %v1257 = vadd.f32 %v1063, %v1186
        %v1258 = vadd.f32 %v1064, %v1189
        %v1259 = vadd.f32 %v1065, %v1192
        %v1260 = vadd.f32 %v1066, %v1195
        %v1261 = vadd.f32 %v1067, %v1198
        %v1262 = vadd.f32 %v1068, %v1201
        %v1263 = vadd.f32 %v1069, %v1204
        %v1264 = vadd.f32 %v1070, %v1207
        %v1265 = vadd.f32 %v1071, %v1210
        %v1266 = vadd.f32 %v1072, %v1213
        %v1267 = vadd.f32 %v1073, %v1216
        %v1268 = vadd.f32 %v1074, %v1219
        %v1269 = vadd.f32 %v1075, %v1222
        %v1270 = vadd.f32 %v1076, %v1225
        %v1271 = vadd.f32 %v1077, %v1228
        %v1272 = vadd.f32 %v1078, %v1231
        %v1273 = vadd.f32 %v1079, %v1234
        %v1274 = vadd.f32 %v1080, %v1237
        %v1275 = vadd.f32 %v1081, %v1240
        %v1276 = vadd.f32 %v1082, %v1243
        %v1277 = vld [vmem:[%s179 + $0x60] sm:$0xff]
        %v1278 = vld [vmem:[%s179 + $0x68] sm:$0xff]
        %v1279 = vld [vmem:[%s179 + $0x70] sm:$0xff]
        %v1280 = vld [vmem:[%s179 + $0x78] sm:$0xff]
        %v1281 = vld [vmem:[%s179 + $0x80] sm:$0xff]
        %v1282 = vld [vmem:[%s179 + $0x88] sm:$0xff]
        %v1283 = vld [vmem:[%s179 + $0x90] sm:$0xff]
        %v1284 = vld [vmem:[%s179 + $0x98] sm:$0xff]
        %v1285 = vld [vmem:[%s179 + $0xa0] sm:$0xff]
        %v1286 = vld [vmem:[%s179 + $0xa8] sm:$0xff]
        %v1287 = vld [vmem:[%s179 + $0xb0] sm:$0xff]
        %v1288 = vld [vmem:[%s179 + $0xb8] sm:$0xff]
        %v1289 = vld [vmem:[%s179 + $0xc0] sm:$0xff]
        %v1290 = vld [vmem:[%s179 + $0xc8] sm:$0xff]
        %v1291 = vld [vmem:[%s179 + $0xd0] sm:$0xff]
        %v1292 = vld [vmem:[%s179 + $0xd8] sm:$0xff]
        %v1293 = vld [vmem:[%s179 + $0xe0] sm:$0xff]
        %v1294 = vld [vmem:[%s179 + $0xe8] sm:$0xff]
        %v1295 = vld [vmem:[%s179 + $0xf0] sm:$0xff]
        %v1296 = vld [vmem:[%s179 + $0xf8] sm:$0xff]
        %v1297 = vld [vmem:[%s179 + $0x100] sm:$0xff]
        %v1298 = vld [vmem:[%s179 + $0x108] sm:$0xff]
        %v1299 = vld [vmem:[%s179 + $0x110] sm:$0xff]
        %v1300 = vld [vmem:[%s179 + $0x118] sm:$0xff]
        %v1301 = vld [vmem:[%s179 + $0x120] sm:$0xff]
        %v1302 = vld [vmem:[%s179 + $0x128] sm:$0xff]
        %v1303 = vld [vmem:[%s179 + $0x130] sm:$0xff]
        %v1304 = vld [vmem:[%s179 + $0x138] sm:$0xff]
        %v1305 = vld [vmem:[%s179 + $0x140] sm:$0xff]
        %v1306 = vld [vmem:[%s179 + $0x148] sm:$0xff]
        %v1307 = vld [vmem:[%s179 + $0x150] sm:$0xff]
        %v1308 = vld [vmem:[%s179 + $0x158] sm:$0xff]
        %s1309 = scalar_lea.vmem [#allocation5], 768
        %v1310 = vld [vmem:[%s1309] sm:$0xff]
        %v1311 = vld [vmem:[%s1309 + $0x8] sm:$0xff]
        %v1312 = vld [vmem:[%s1309 + $0x10] sm:$0xff]
        %v1313 = vld [vmem:[%s1309 + $0x18] sm:$0xff]
        %v1314 = vld [vmem:[%s1309 + $0x20] sm:$0xff]
        %v1315 = vld [vmem:[%s1309 + $0x28] sm:$0xff]
        %v1316 = vld [vmem:[%s1309 + $0x30] sm:$0xff]
        %v1317 = vld [vmem:[%s1309 + $0x38] sm:$0xff]
        %v1318 = vld [vmem:[%s1309 + $0x40] sm:$0xff]
        %v1319 = vld [vmem:[%s1309 + $0x48] sm:$0xff]
        %v1320 = vld [vmem:[%s1309 + $0x50] sm:$0xff]
        %v1321 = vld [vmem:[%s1309 + $0x58] sm:$0xff]
        %v1322 = vld [vmem:[%s1309 + $0x60] sm:$0xff]
        %v1323 = vld [vmem:[%s1309 + $0x68] sm:$0xff]
        %v1324 = vld [vmem:[%s1309 + $0x70] sm:$0xff]
        %v1325 = vld [vmem:[%s1309 + $0x78] sm:$0xff]
        %1326 = vmatpush.msra.mxu0 %v1325
        %1327 = vmatpush.msra.mxu0 %v1324
        %1328 = vmatpush.msra.mxu0 %v1323
        %1329 = vmatpush.msra.mxu0 %v1322
        %1330 = vmatpush.msra.mxu0 %v1321
        %1331 = vmatpush.msra.mxu0 %v1320
        %1332 = vmatpush.msra.mxu0 %v1319
        %1333 = vmatpush.msra.mxu0 %v1318
        %1334 = vmatpush.msra.mxu0 %v1317
        %1335 = vmatpush.msra.mxu0 %v1316
        %1336 = vmatpush.msra.mxu0 %v1315
        %1337 = vmatpush.msra.mxu0 %v1314
        %1338 = vmatpush.msra.mxu0 %v1313
        %1339 = vmatpush.msra.mxu0 %v1312
        %1340 = vmatpush.msra.mxu0 %v1311
        %1341 = vmatpush.msra.mxu0 %v1310
        %1342 = vmatmul.f32.gmra.mxu0 %v1277
        %v1343 = vpop.f32.mrf.mxu0
        %v1344 = vadd.f32 0.0, %v1343
        %1345 = vmatmul.f32.gmra.mxu0 %v1278
        %v1346 = vpop.f32.mrf.mxu0
        %v1347 = vadd.f32 0.0, %v1346
        %1348 = vmatmul.f32.gmra.mxu0 %v1279
        %v1349 = vpop.f32.mrf.mxu0
        %v1350 = vadd.f32 0.0, %v1349
        %1351 = vmatmul.f32.gmra.mxu0 %v1280
        %v1352 = vpop.f32.mrf.mxu0
        %v1353 = vadd.f32 0.0, %v1352
        %1354 = vmatmul.f32.gmra.mxu0 %v1281
        %v1355 = vpop.f32.mrf.mxu0
        %v1356 = vadd.f32 0.0, %v1355
        %1357 = vmatmul.f32.gmra.mxu0 %v1282
        %v1358 = vpop.f32.mrf.mxu0
        %v1359 = vadd.f32 0.0, %v1358
        %1360 = vmatmul.f32.gmra.mxu0 %v1283
        %v1361 = vpop.f32.mrf.mxu0
        %v1362 = vadd.f32 0.0, %v1361
        %1363 = vmatmul.f32.gmra.mxu0 %v1284
        %v1364 = vpop.f32.mrf.mxu0
        %v1365 = vadd.f32 0.0, %v1364
        %1366 = vmatmul.f32.gmra.mxu0 %v1285
        %v1367 = vpop.f32.mrf.mxu0
        %v1368 = vadd.f32 0.0, %v1367
        %1369 = vmatmul.f32.gmra.mxu0 %v1286
        %v1370 = vpop.f32.mrf.mxu0
        %v1371 = vadd.f32 0.0, %v1370
        %1372 = vmatmul.f32.gmra.mxu0 %v1287
        %v1373 = vpop.f32.mrf.mxu0
        %v1374 = vadd.f32 0.0, %v1373
        %1375 = vmatmul.f32.gmra.mxu0 %v1288
        %v1376 = vpop.f32.mrf.mxu0
        %v1377 = vadd.f32 0.0, %v1376
        %1378 = vmatmul.f32.gmra.mxu0 %v1289
        %v1379 = vpop.f32.mrf.mxu0
        %v1380 = vadd.f32 0.0, %v1379
        %1381 = vmatmul.f32.gmra.mxu0 %v1290
        %v1382 = vpop.f32.mrf.mxu0
        %v1383 = vadd.f32 0.0, %v1382
        %1384 = vmatmul.f32.gmra.mxu0 %v1291
        %v1385 = vpop.f32.mrf.mxu0
        %v1386 = vadd.f32 0.0, %v1385
        %1387 = vmatmul.f32.gmra.mxu0 %v1292
        %v1388 = vpop.f32.mrf.mxu0
        %v1389 = vadd.f32 0.0, %v1388
        %1390 = vmatmul.f32.gmra.mxu0 %v1293
        %v1391 = vpop.f32.mrf.mxu0
        %v1392 = vadd.f32 0.0, %v1391
        %1393 = vmatmul.f32.gmra.mxu0 %v1294
        %v1394 = vpop.f32.mrf.mxu0
        %v1395 = vadd.f32 0.0, %v1394
        %1396 = vmatmul.f32.gmra.mxu0 %v1295
        %v1397 = vpop.f32.mrf.mxu0
        %v1398 = vadd.f32 0.0, %v1397
        %1399 = vmatmul.f32.gmra.mxu0 %v1296
        %v1400 = vpop.f32.mrf.mxu0
        %v1401 = vadd.f32 0.0, %v1400
        %1402 = vmatmul.f32.gmra.mxu0 %v1297
        %v1403 = vpop.f32.mrf.mxu0
        %v1404 = vadd.f32 0.0, %v1403
        %1405 = vmatmul.f32.gmra.mxu0 %v1298
        %v1406 = vpop.f32.mrf.mxu0
        %v1407 = vadd.f32 0.0, %v1406
        %1408 = vmatmul.f32.gmra.mxu0 %v1299
        %v1409 = vpop.f32.mrf.mxu0
        %v1410 = vadd.f32 0.0, %v1409
        %1411 = vmatmul.f32.gmra.mxu0 %v1300
        %v1412 = vpop.f32.mrf.mxu0
        %v1413 = vadd.f32 0.0, %v1412
        %1414 = vmatmul.f32.gmra.mxu0 %v1301
        %v1415 = vpop.f32.mrf.mxu0
        %v1416 = vadd.f32 0.0, %v1415
        %1417 = vmatmul.f32.gmra.mxu0 %v1302
        %v1418 = vpop.f32.mrf.mxu0
        %v1419 = vadd.f32 0.0, %v1418
        %1420 = vmatmul.f32.gmra.mxu0 %v1303
        %v1421 = vpop.f32.mrf.mxu0
        %v1422 = vadd.f32 0.0, %v1421
        %1423 = vmatmul.f32.gmra.mxu0 %v1304
        %v1424 = vpop.f32.mrf.mxu0
        %v1425 = vadd.f32 0.0, %v1424
        %1426 = vmatmul.f32.gmra.mxu0 %v1305
        %v1427 = vpop.f32.mrf.mxu0
        %v1428 = vadd.f32 0.0, %v1427
        %1429 = vmatmul.f32.gmra.mxu0 %v1306
        %v1430 = vpop.f32.mrf.mxu0
        %v1431 = vadd.f32 0.0, %v1430
        %1432 = vmatmul.f32.gmra.mxu0 %v1307
        %v1433 = vpop.f32.mrf.mxu0
        %v1434 = vadd.f32 0.0, %v1433
        %1435 = vmatmul.f32.gmra.mxu0 %v1308
        %v1436 = vpop.f32.mrf.mxu0
        %v1437 = vadd.f32 0.0, %v1436
        %1438 = vdwg.mxu0
        %v1439 = vadd.f32 %v1245, %v1344
        %v1440 = vadd.f32 %v1246, %v1347
        %v1441 = vadd.f32 %v1247, %v1350
        %v1442 = vadd.f32 %v1248, %v1353
        %v1443 = vadd.f32 %v1249, %v1356
        %v1444 = vadd.f32 %v1250, %v1359
        %v1445 = vadd.f32 %v1251, %v1362
        %v1446 = vadd.f32 %v1252, %v1365
        %v1447 = vadd.f32 %v1253, %v1368
        %v1448 = vadd.f32 %v1254, %v1371
        %v1449 = vadd.f32 %v1255, %v1374
        %v1450 = vadd.f32 %v1256, %v1377
        %v1451 = vadd.f32 %v1257, %v1380
        %v1452 = vadd.f32 %v1258, %v1383
        %v1453 = vadd.f32 %v1259, %v1386
        %v1454 = vadd.f32 %v1260, %v1389
        %v1455 = vadd.f32 %v1261, %v1392
        %v1456 = vadd.f32 %v1262, %v1395
        %v1457 = vadd.f32 %v1263, %v1398
        %v1458 = vadd.f32 %v1264, %v1401
        %v1459 = vadd.f32 %v1265, %v1404
        %v1460 = vadd.f32 %v1266, %v1407
        %v1461 = vadd.f32 %v1267, %v1410
        %v1462 = vadd.f32 %v1268, %v1413
        %v1463 = vadd.f32 %v1269, %v1416
        %v1464 = vadd.f32 %v1270, %v1419
        %v1465 = vadd.f32 %v1271, %v1422
        %v1466 = vadd.f32 %v1272, %v1425
        %v1467 = vadd.f32 %v1273, %v1428
        %v1468 = vadd.f32 %v1274, %v1431
        %v1469 = vadd.f32 %v1275, %v1434
        %v1470 = vadd.f32 %v1276, %v1437
        %v1471 = vld [vmem:[%s179 + $0x70] sm:$0xff]
        %v1472 = vld [vmem:[%s179 + $0x78] sm:$0xff]
        %v1473 = vld [vmem:[%s179 + $0x80] sm:$0xff]
        %v1474 = vld [vmem:[%s179 + $0x88] sm:$0xff]
        %v1475 = vld [vmem:[%s179 + $0x90] sm:$0xff]
        %v1476 = vld [vmem:[%s179 + $0x98] sm:$0xff]
        %v1477 = vld [vmem:[%s179 + $0xa0] sm:$0xff]
        %v1478 = vld [vmem:[%s179 + $0xa8] sm:$0xff]
        %v1479 = vld [vmem:[%s179 + $0xb0] sm:$0xff]
        %v1480 = vld [vmem:[%s179 + $0xb8] sm:$0xff]
        %v1481 = vld [vmem:[%s179 + $0xc0] sm:$0xff]
        %v1482 = vld [vmem:[%s179 + $0xc8] sm:$0xff]
        %v1483 = vld [vmem:[%s179 + $0xd0] sm:$0xff]
        %v1484 = vld [vmem:[%s179 + $0xd8] sm:$0xff]
        %v1485 = vld [vmem:[%s179 + $0xe0] sm:$0xff]
        %v1486 = vld [vmem:[%s179 + $0xe8] sm:$0xff]
        %v1487 = vld [vmem:[%s179 + $0xf0] sm:$0xff]
        %v1488 = vld [vmem:[%s179 + $0xf8] sm:$0xff]
        %v1489 = vld [vmem:[%s179 + $0x100] sm:$0xff]
        %v1490 = vld [vmem:[%s179 + $0x108] sm:$0xff]
        %v1491 = vld [vmem:[%s179 + $0x110] sm:$0xff]
        %v1492 = vld [vmem:[%s179 + $0x118] sm:$0xff]
        %v1493 = vld [vmem:[%s179 + $0x120] sm:$0xff]
        %v1494 = vld [vmem:[%s179 + $0x128] sm:$0xff]
        %v1495 = vld [vmem:[%s179 + $0x130] sm:$0xff]
        %v1496 = vld [vmem:[%s179 + $0x138] sm:$0xff]
        %v1497 = vld [vmem:[%s179 + $0x140] sm:$0xff]
        %v1498 = vld [vmem:[%s179 + $0x148] sm:$0xff]
        %v1499 = vld [vmem:[%s179 + $0x150] sm:$0xff]
        %v1500 = vld [vmem:[%s179 + $0x158] sm:$0xff]
        %v1501 = vld [vmem:[%s179 + $0x160] sm:$0xff]
        %v1502 = vld [vmem:[%s179 + $0x168] sm:$0xff]
        %s1503 = scalar_lea.vmem [#allocation5], 896
        %v1504 = vld [vmem:[%s1503] sm:$0xff]
        %v1505 = vld [vmem:[%s1503 + $0x8] sm:$0xff]
        %v1506 = vld [vmem:[%s1503 + $0x10] sm:$0xff]
        %v1507 = vld [vmem:[%s1503 + $0x18] sm:$0xff]
        %v1508 = vld [vmem:[%s1503 + $0x20] sm:$0xff]
        %v1509 = vld [vmem:[%s1503 + $0x28] sm:$0xff]
        %v1510 = vld [vmem:[%s1503 + $0x30] sm:$0xff]
        %v1511 = vld [vmem:[%s1503 + $0x38] sm:$0xff]
        %v1512 = vld [vmem:[%s1503 + $0x40] sm:$0xff]
        %v1513 = vld [vmem:[%s1503 + $0x48] sm:$0xff]
        %v1514 = vld [vmem:[%s1503 + $0x50] sm:$0xff]
        %v1515 = vld [vmem:[%s1503 + $0x58] sm:$0xff]
        %v1516 = vld [vmem:[%s1503 + $0x60] sm:$0xff]
        %v1517 = vld [vmem:[%s1503 + $0x68] sm:$0xff]
        %v1518 = vld [vmem:[%s1503 + $0x70] sm:$0xff]
        %v1519 = vld [vmem:[%s1503 + $0x78] sm:$0xff]
        %1520 = vmatpush.msra.mxu0 %v1519
        %1521 = vmatpush.msra.mxu0 %v1518
        %1522 = vmatpush.msra.mxu0 %v1517
        %1523 = vmatpush.msra.mxu0 %v1516
        %1524 = vmatpush.msra.mxu0 %v1515
        %1525 = vmatpush.msra.mxu0 %v1514
        %1526 = vmatpush.msra.mxu0 %v1513
        %1527 = vmatpush.msra.mxu0 %v1512
        %1528 = vmatpush.msra.mxu0 %v1511
        %1529 = vmatpush.msra.mxu0 %v1510
        %1530 = vmatpush.msra.mxu0 %v1509
        %1531 = vmatpush.msra.mxu0 %v1508
        %1532 = vmatpush.msra.mxu0 %v1507
        %1533 = vmatpush.msra.mxu0 %v1506
        %1534 = vmatpush.msra.mxu0 %v1505
        %1535 = vmatpush.msra.mxu0 %v1504
        %1536 = vmatmul.f32.gmra.mxu0 %v1471
        %v1537 = vpop.f32.mrf.mxu0
        %v1538 = vadd.f32 0.0, %v1537
        %1539 = vmatmul.f32.gmra.mxu0 %v1472
        %v1540 = vpop.f32.mrf.mxu0
        %v1541 = vadd.f32 0.0, %v1540
        %1542 = vmatmul.f32.gmra.mxu0 %v1473
        %v1543 = vpop.f32.mrf.mxu0
        %v1544 = vadd.f32 0.0, %v1543
        %1545 = vmatmul.f32.gmra.mxu0 %v1474
        %v1546 = vpop.f32.mrf.mxu0
        %v1547 = vadd.f32 0.0, %v1546
        %1548 = vmatmul.f32.gmra.mxu0 %v1475
        %v1549 = vpop.f32.mrf.mxu0
        %v1550 = vadd.f32 0.0, %v1549
        %1551 = vmatmul.f32.gmra.mxu0 %v1476
        %v1552 = vpop.f32.mrf.mxu0
        %v1553 = vadd.f32 0.0, %v1552
        %1554 = vmatmul.f32.gmra.mxu0 %v1477
        %v1555 = vpop.f32.mrf.mxu0
        %v1556 = vadd.f32 0.0, %v1555
        %1557 = vmatmul.f32.gmra.mxu0 %v1478
        %v1558 = vpop.f32.mrf.mxu0
        %v1559 = vadd.f32 0.0, %v1558
        %1560 = vmatmul.f32.gmra.mxu0 %v1479
        %v1561 = vpop.f32.mrf.mxu0
        %v1562 = vadd.f32 0.0, %v1561
        %1563 = vmatmul.f32.gmra.mxu0 %v1480
        %v1564 = vpop.f32.mrf.mxu0
        %v1565 = vadd.f32 0.0, %v1564
        %1566 = vmatmul.f32.gmra.mxu0 %v1481
        %v1567 = vpop.f32.mrf.mxu0
        %v1568 = vadd.f32 0.0, %v1567
        %1569 = vmatmul.f32.gmra.mxu0 %v1482
        %v1570 = vpop.f32.mrf.mxu0
        %v1571 = vadd.f32 0.0, %v1570
        %1572 = vmatmul.f32.gmra.mxu0 %v1483
        %v1573 = vpop.f32.mrf.mxu0
        %v1574 = vadd.f32 0.0, %v1573
        %1575 = vmatmul.f32.gmra.mxu0 %v1484
        %v1576 = vpop.f32.mrf.mxu0
        %v1577 = vadd.f32 0.0, %v1576
        %1578 = vmatmul.f32.gmra.mxu0 %v1485
        %v1579 = vpop.f32.mrf.mxu0
        %v1580 = vadd.f32 0.0, %v1579
        %1581 = vmatmul.f32.gmra.mxu0 %v1486
        %v1582 = vpop.f32.mrf.mxu0
        %v1583 = vadd.f32 0.0, %v1582
        %1584 = vmatmul.f32.gmra.mxu0 %v1487
        %v1585 = vpop.f32.mrf.mxu0
        %v1586 = vadd.f32 0.0, %v1585
        %1587 = vmatmul.f32.gmra.mxu0 %v1488
        %v1588 = vpop.f32.mrf.mxu0
        %v1589 = vadd.f32 0.0, %v1588
        %1590 = vmatmul.f32.gmra.mxu0 %v1489
        %v1591 = vpop.f32.mrf.mxu0
        %v1592 = vadd.f32 0.0, %v1591
        %1593 = vmatmul.f32.gmra.mxu0 %v1490
        %v1594 = vpop.f32.mrf.mxu0
        %v1595 = vadd.f32 0.0, %v1594
        %1596 = vmatmul.f32.gmra.mxu0 %v1491
        %v1597 = vpop.f32.mrf.mxu0
        %v1598 = vadd.f32 0.0, %v1597
        %1599 = vmatmul.f32.gmra.mxu0 %v1492
        %v1600 = vpop.f32.mrf.mxu0
        %v1601 = vadd.f32 0.0, %v1600
        %1602 = vmatmul.f32.gmra.mxu0 %v1493
        %v1603 = vpop.f32.mrf.mxu0
        %v1604 = vadd.f32 0.0, %v1603
        %1605 = vmatmul.f32.gmra.mxu0 %v1494
        %v1606 = vpop.f32.mrf.mxu0
        %v1607 = vadd.f32 0.0, %v1606
        %1608 = vmatmul.f32.gmra.mxu0 %v1495
        %v1609 = vpop.f32.mrf.mxu0
        %v1610 = vadd.f32 0.0, %v1609
        %1611 = vmatmul.f32.gmra.mxu0 %v1496
        %v1612 = vpop.f32.mrf.mxu0
        %v1613 = vadd.f32 0.0, %v1612
        %1614 = vmatmul.f32.gmra.mxu0 %v1497
        %v1615 = vpop.f32.mrf.mxu0
        %v1616 = vadd.f32 0.0, %v1615
        %1617 = vmatmul.f32.gmra.mxu0 %v1498
        %v1618 = vpop.f32.mrf.mxu0
        %v1619 = vadd.f32 0.0, %v1618
        %1620 = vmatmul.f32.gmra.mxu0 %v1499
        %v1621 = vpop.f32.mrf.mxu0
        %v1622 = vadd.f32 0.0, %v1621
        %1623 = vmatmul.f32.gmra.mxu0 %v1500
        %v1624 = vpop.f32.mrf.mxu0
        %v1625 = vadd.f32 0.0, %v1624
        %1626 = vmatmul.f32.gmra.mxu0 %v1501
        %v1627 = vpop.f32.mrf.mxu0
        %v1628 = vadd.f32 0.0, %v1627
        %1629 = vmatmul.f32.gmra.mxu0 %v1502
        %v1630 = vpop.f32.mrf.mxu0
        %v1631 = vadd.f32 0.0, %v1630
        %1632 = vdwg.mxu0
        %v1633 = vadd.f32 %v1439, %v1538
        %v1634 = vadd.f32 %v1440, %v1541
        %v1635 = vadd.f32 %v1441, %v1544
        %v1636 = vadd.f32 %v1442, %v1547
        %v1637 = vadd.f32 %v1443, %v1550
        %v1638 = vadd.f32 %v1444, %v1553
        %v1639 = vadd.f32 %v1445, %v1556
        %v1640 = vadd.f32 %v1446, %v1559
        %v1641 = vadd.f32 %v1447, %v1562
        %v1642 = vadd.f32 %v1448, %v1565
        %v1643 = vadd.f32 %v1449, %v1568
        %v1644 = vadd.f32 %v1450, %v1571
        %v1645 = vadd.f32 %v1451, %v1574
        %v1646 = vadd.f32 %v1452, %v1577
        %v1647 = vadd.f32 %v1453, %v1580
        %v1648 = vadd.f32 %v1454, %v1583
        %v1649 = vadd.f32 %v1455, %v1586
        %v1650 = vadd.f32 %v1456, %v1589
        %v1651 = vadd.f32 %v1457, %v1592
        %v1652 = vadd.f32 %v1458, %v1595
        %v1653 = vadd.f32 %v1459, %v1598
        %v1654 = vadd.f32 %v1460, %v1601
        %v1655 = vadd.f32 %v1461, %v1604
        %v1656 = vadd.f32 %v1462, %v1607
        %v1657 = vadd.f32 %v1463, %v1610
        %v1658 = vadd.f32 %v1464, %v1613
        %v1659 = vadd.f32 %v1465, %v1616
        %v1660 = vadd.f32 %v1466, %v1619
        %v1661 = vadd.f32 %v1467, %v1622
        %v1662 = vadd.f32 %v1468, %v1625
        %v1663 = vadd.f32 %v1469, %v1628
        %v1664 = vadd.f32 %v1470, %v1631
        %v1665 = vld [vmem:[%s179 + $0x80] sm:$0xff]
        %v1666 = vld [vmem:[%s179 + $0x88] sm:$0xff]
        %v1667 = vld [vmem:[%s179 + $0x90] sm:$0xff]
        %v1668 = vld [vmem:[%s179 + $0x98] sm:$0xff]
        %v1669 = vld [vmem:[%s179 + $0xa0] sm:$0xff]
        %v1670 = vld [vmem:[%s179 + $0xa8] sm:$0xff]
        %v1671 = vld [vmem:[%s179 + $0xb0] sm:$0xff]
        %v1672 = vld [vmem:[%s179 + $0xb8] sm:$0xff]
        %v1673 = vld [vmem:[%s179 + $0xc0] sm:$0xff]
        %v1674 = vld [vmem:[%s179 + $0xc8] sm:$0xff]
        %v1675 = vld [vmem:[%s179 + $0xd0] sm:$0xff]
        %v1676 = vld [vmem:[%s179 + $0xd8] sm:$0xff]
        %v1677 = vld [vmem:[%s179 + $0xe0] sm:$0xff]
        %v1678 = vld [vmem:[%s179 + $0xe8] sm:$0xff]
        %v1679 = vld [vmem:[%s179 + $0xf0] sm:$0xff]
        %v1680 = vld [vmem:[%s179 + $0xf8] sm:$0xff]
        %v1681 = vld [vmem:[%s179 + $0x100] sm:$0xff]
        %v1682 = vld [vmem:[%s179 + $0x108] sm:$0xff]
        %v1683 = vld [vmem:[%s179 + $0x110] sm:$0xff]
        %v1684 = vld [vmem:[%s179 + $0x118] sm:$0xff]
        %v1685 = vld [vmem:[%s179 + $0x120] sm:$0xff]
        %v1686 = vld [vmem:[%s179 + $0x128] sm:$0xff]
        %v1687 = vld [vmem:[%s179 + $0x130] sm:$0xff]
        %v1688 = vld [vmem:[%s179 + $0x138] sm:$0xff]
        %v1689 = vld [vmem:[%s179 + $0x140] sm:$0xff]
        %v1690 = vld [vmem:[%s179 + $0x148] sm:$0xff]
        %v1691 = vld [vmem:[%s179 + $0x150] sm:$0xff]
        %v1692 = vld [vmem:[%s179 + $0x158] sm:$0xff]
        %v1693 = vld [vmem:[%s179 + $0x160] sm:$0xff]
        %v1694 = vld [vmem:[%s179 + $0x168] sm:$0xff]
        %v1695 = vld [vmem:[%s179 + $0x170] sm:$0xff]
        %v1696 = vld [vmem:[%s179 + $0x178] sm:$0xff]
        %s1697 = scalar_lea.vmem [#allocation5], 1024
        %v1698 = vld [vmem:[%s1697] sm:$0xff]
        %v1699 = vld [vmem:[%s1697 + $0x8] sm:$0xff]
        %v1700 = vld [vmem:[%s1697 + $0x10] sm:$0xff]
        %v1701 = vld [vmem:[%s1697 + $0x18] sm:$0xff]
        %v1702 = vld [vmem:[%s1697 + $0x20] sm:$0xff]
        %v1703 = vld [vmem:[%s1697 + $0x28] sm:$0xff]
        %v1704 = vld [vmem:[%s1697 + $0x30] sm:$0xff]
        %v1705 = vld [vmem:[%s1697 + $0x38] sm:$0xff]
        %v1706 = vld [vmem:[%s1697 + $0x40] sm:$0xff]
        %v1707 = vld [vmem:[%s1697 + $0x48] sm:$0xff]
        %v1708 = vld [vmem:[%s1697 + $0x50] sm:$0xff]
        %v1709 = vld [vmem:[%s1697 + $0x58] sm:$0xff]
        %v1710 = vld [vmem:[%s1697 + $0x60] sm:$0xff]
        %v1711 = vld [vmem:[%s1697 + $0x68] sm:$0xff]
        %v1712 = vld [vmem:[%s1697 + $0x70] sm:$0xff]
        %v1713 = vld [vmem:[%s1697 + $0x78] sm:$0xff]
        %1714 = vmatpush.msra.mxu0 %v1713
        %1715 = vmatpush.msra.mxu0 %v1712
        %1716 = vmatpush.msra.mxu0 %v1711
        %1717 = vmatpush.msra.mxu0 %v1710
        %1718 = vmatpush.msra.mxu0 %v1709
        %1719 = vmatpush.msra.mxu0 %v1708
        %1720 = vmatpush.msra.mxu0 %v1707
        %1721 = vmatpush.msra.mxu0 %v1706
        %1722 = vmatpush.msra.mxu0 %v1705
        %1723 = vmatpush.msra.mxu0 %v1704
        %1724 = vmatpush.msra.mxu0 %v1703
        %1725 = vmatpush.msra.mxu0 %v1702
        %1726 = vmatpush.msra.mxu0 %v1701
        %1727 = vmatpush.msra.mxu0 %v1700
        %1728 = vmatpush.msra.mxu0 %v1699
        %1729 = vmatpush.msra.mxu0 %v1698
        %1730 = vmatmul.f32.gmra.mxu0 %v1665
        %v1731 = vpop.f32.mrf.mxu0
        %v1732 = vadd.f32 0.0, %v1731
        %1733 = vmatmul.f32.gmra.mxu0 %v1666
        %v1734 = vpop.f32.mrf.mxu0
        %v1735 = vadd.f32 0.0, %v1734
        %1736 = vmatmul.f32.gmra.mxu0 %v1667
        %v1737 = vpop.f32.mrf.mxu0
        %v1738 = vadd.f32 0.0, %v1737
        %1739 = vmatmul.f32.gmra.mxu0 %v1668
        %v1740 = vpop.f32.mrf.mxu0
        %v1741 = vadd.f32 0.0, %v1740
        %1742 = vmatmul.f32.gmra.mxu0 %v1669
        %v1743 = vpop.f32.mrf.mxu0
        %v1744 = vadd.f32 0.0, %v1743
        %1745 = vmatmul.f32.gmra.mxu0 %v1670
        %v1746 = vpop.f32.mrf.mxu0
        %v1747 = vadd.f32 0.0, %v1746
        %1748 = vmatmul.f32.gmra.mxu0 %v1671
        %v1749 = vpop.f32.mrf.mxu0
        %v1750 = vadd.f32 0.0, %v1749
        %1751 = vmatmul.f32.gmra.mxu0 %v1672
        %v1752 = vpop.f32.mrf.mxu0
        %v1753 = vadd.f32 0.0, %v1752
        %1754 = vmatmul.f32.gmra.mxu0 %v1673
        %v1755 = vpop.f32.mrf.mxu0
        %v1756 = vadd.f32 0.0, %v1755
        %1757 = vmatmul.f32.gmra.mxu0 %v1674
        %v1758 = vpop.f32.mrf.mxu0
        %v1759 = vadd.f32 0.0, %v1758
        %1760 = vmatmul.f32.gmra.mxu0 %v1675
        %v1761 = vpop.f32.mrf.mxu0
        %v1762 = vadd.f32 0.0, %v1761
        %1763 = vmatmul.f32.gmra.mxu0 %v1676
        %v1764 = vpop.f32.mrf.mxu0
        %v1765 = vadd.f32 0.0, %v1764
        %1766 = vmatmul.f32.gmra.mxu0 %v1677
        %v1767 = vpop.f32.mrf.mxu0
        %v1768 = vadd.f32 0.0, %v1767
        %1769 = vmatmul.f32.gmra.mxu0 %v1678
        %v1770 = vpop.f32.mrf.mxu0
        %v1771 = vadd.f32 0.0, %v1770
        %1772 = vmatmul.f32.gmra.mxu0 %v1679
        %v1773 = vpop.f32.mrf.mxu0
        %v1774 = vadd.f32 0.0, %v1773
        %1775 = vmatmul.f32.gmra.mxu0 %v1680
        %v1776 = vpop.f32.mrf.mxu0
        %v1777 = vadd.f32 0.0, %v1776
        %1778 = vmatmul.f32.gmra.mxu0 %v1681
        %v1779 = vpop.f32.mrf.mxu0
        %v1780 = vadd.f32 0.0, %v1779
        %1781 = vmatmul.f32.gmra.mxu0 %v1682
        %v1782 = vpop.f32.mrf.mxu0
        %v1783 = vadd.f32 0.0, %v1782
        %1784 = vmatmul.f32.gmra.mxu0 %v1683
        %v1785 = vpop.f32.mrf.mxu0
        %v1786 = vadd.f32 0.0, %v1785
        %1787 = vmatmul.f32.gmra.mxu0 %v1684
        %v1788 = vpop.f32.mrf.mxu0
        %v1789 = vadd.f32 0.0, %v1788
        %1790 = vmatmul.f32.gmra.mxu0 %v1685
        %v1791 = vpop.f32.mrf.mxu0
        %v1792 = vadd.f32 0.0, %v1791
        %1793 = vmatmul.f32.gmra.mxu0 %v1686
        %v1794 = vpop.f32.mrf.mxu0
        %v1795 = vadd.f32 0.0, %v1794
        %1796 = vmatmul.f32.gmra.mxu0 %v1687
        %v1797 = vpop.f32.mrf.mxu0
        %v1798 = vadd.f32 0.0, %v1797
        %1799 = vmatmul.f32.gmra.mxu0 %v1688
        %v1800 = vpop.f32.mrf.mxu0
        %v1801 = vadd.f32 0.0, %v1800
        %1802 = vmatmul.f32.gmra.mxu0 %v1689
        %v1803 = vpop.f32.mrf.mxu0
        %v1804 = vadd.f32 0.0, %v1803
        %1805 = vmatmul.f32.gmra.mxu0 %v1690
        %v1806 = vpop.f32.mrf.mxu0
        %v1807 = vadd.f32 0.0, %v1806
        %1808 = vmatmul.f32.gmra.mxu0 %v1691
        %v1809 = vpop.f32.mrf.mxu0
        %v1810 = vadd.f32 0.0, %v1809
        %1811 = vmatmul.f32.gmra.mxu0 %v1692
        %v1812 = vpop.f32.mrf.mxu0
        %v1813 = vadd.f32 0.0, %v1812
        %1814 = vmatmul.f32.gmra.mxu0 %v1693
        %v1815 = vpop.f32.mrf.mxu0
        %v1816 = vadd.f32 0.0, %v1815
        %1817 = vmatmul.f32.gmra.mxu0 %v1694
        %v1818 = vpop.f32.mrf.mxu0
        %v1819 = vadd.f32 0.0, %v1818
        %1820 = vmatmul.f32.gmra.mxu0 %v1695
        %v1821 = vpop.f32.mrf.mxu0
        %v1822 = vadd.f32 0.0, %v1821
        %1823 = vmatmul.f32.gmra.mxu0 %v1696
        %v1824 = vpop.f32.mrf.mxu0
        %v1825 = vadd.f32 0.0, %v1824
        %1826 = vdwg.mxu0
        %v1827 = vadd.f32 %v1633, %v1732
        %v1828 = vadd.f32 %v1634, %v1735
        %v1829 = vadd.f32 %v1635, %v1738
        %v1830 = vadd.f32 %v1636, %v1741
        %v1831 = vadd.f32 %v1637, %v1744
        %v1832 = vadd.f32 %v1638, %v1747
        %v1833 = vadd.f32 %v1639, %v1750
        %v1834 = vadd.f32 %v1640, %v1753
        %v1835 = vadd.f32 %v1641, %v1756
        %v1836 = vadd.f32 %v1642, %v1759
        %v1837 = vadd.f32 %v1643, %v1762
        %v1838 = vadd.f32 %v1644, %v1765
        %v1839 = vadd.f32 %v1645, %v1768
        %v1840 = vadd.f32 %v1646, %v1771
        %v1841 = vadd.f32 %v1647, %v1774
        %v1842 = vadd.f32 %v1648, %v1777
        %v1843 = vadd.f32 %v1649, %v1780
        %v1844 = vadd.f32 %v1650, %v1783
        %v1845 = vadd.f32 %v1651, %v1786
        %v1846 = vadd.f32 %v1652, %v1789
        %v1847 = vadd.f32 %v1653, %v1792
        %v1848 = vadd.f32 %v1654, %v1795
        %v1849 = vadd.f32 %v1655, %v1798
        %v1850 = vadd.f32 %v1656, %v1801
        %v1851 = vadd.f32 %v1657, %v1804
        %v1852 = vadd.f32 %v1658, %v1807
        %v1853 = vadd.f32 %v1659, %v1810
        %v1854 = vadd.f32 %v1660, %v1813
        %v1855 = vadd.f32 %v1661, %v1816
        %v1856 = vadd.f32 %v1662, %v1819
        %v1857 = vadd.f32 %v1663, %v1822
        %v1858 = vadd.f32 %v1664, %v1825
        %v1859 = vld [vmem:[%s2] sm:$0x1]
        %v1861 = vperm.slane %v1859, 0
        %v1863 = vadd.f32 %v1827, %v1861
        %v1864 = vadd.f32 %v1828, %v1861
        %v1865 = vadd.f32 %v1829, %v1861
        %v1866 = vadd.f32 %v1830, %v1861
        %v1867 = vadd.f32 %v1831, %v1861
        %v1868 = vadd.f32 %v1832, %v1861
        %v1869 = vadd.f32 %v1833, %v1861
        %v1870 = vadd.f32 %v1834, %v1861
        %v1871 = vadd.f32 %v1835, %v1861
        %v1872 = vadd.f32 %v1836, %v1861
        %v1873 = vadd.f32 %v1837, %v1861
        %v1874 = vadd.f32 %v1838, %v1861
        %v1875 = vadd.f32 %v1839, %v1861
        %v1876 = vadd.f32 %v1840, %v1861
        %v1877 = vadd.f32 %v1841, %v1861
        %v1878 = vadd.f32 %v1842, %v1861
        %v1879 = vadd.f32 %v1843, %v1861
        %v1880 = vadd.f32 %v1844, %v1861
        %v1881 = vadd.f32 %v1845, %v1861
        %v1882 = vadd.f32 %v1846, %v1861
        %v1883 = vadd.f32 %v1847, %v1861
        %v1884 = vadd.f32 %v1848, %v1861
        %v1885 = vadd.f32 %v1849, %v1861
        %v1886 = vadd.f32 %v1850, %v1861
        %v1887 = vadd.f32 %v1851, %v1861
        %v1888 = vadd.f32 %v1852, %v1861
        %v1889 = vadd.f32 %v1853, %v1861
        %v1890 = vadd.f32 %v1854, %v1861
        %v1891 = vadd.f32 %v1855, %v1861
        %v1892 = vadd.f32 %v1856, %v1861
        %v1893 = vadd.f32 %v1857, %v1861
        %v1894 = vadd.f32 %v1858, %v1861
        %v1895 = vmax.f32 %v1863, 0.0
        %v1896 = vmax.f32 %v1864, 0.0
        %v1897 = vmax.f32 %v1865, 0.0
        %v1898 = vmax.f32 %v1866, 0.0
        %v1899 = vmax.f32 %v1867, 0.0
        %v1900 = vmax.f32 %v1868, 0.0
        %v1901 = vmax.f32 %v1869, 0.0
        %v1902 = vmax.f32 %v1870, 0.0
        %v1903 = vmax.f32 %v1871, 0.0
        %v1904 = vmax.f32 %v1872, 0.0
        %v1905 = vmax.f32 %v1873, 0.0
        %v1906 = vmax.f32 %v1874, 0.0
        %v1907 = vmax.f32 %v1875, 0.0
        %v1908 = vmax.f32 %v1876, 0.0
        %v1909 = vmax.f32 %v1877, 0.0
        %v1910 = vmax.f32 %v1878, 0.0
        %v1911 = vmax.f32 %v1879, 0.0
        %v1912 = vmax.f32 %v1880, 0.0
        %v1913 = vmax.f32 %v1881, 0.0
        %v1914 = vmax.f32 %v1882, 0.0
        %v1915 = vmax.f32 %v1883, 0.0
        %v1916 = vmax.f32 %v1884, 0.0
        %v1917 = vmax.f32 %v1885, 0.0
        %v1918 = vmax.f32 %v1886, 0.0
        %v1919 = vmax.f32 %v1887, 0.0
        %v1920 = vmax.f32 %v1888, 0.0
        %v1921 = vmax.f32 %v1889, 0.0
        %v1922 = vmax.f32 %v1890, 0.0
        %v1923 = vmax.f32 %v1891, 0.0
        %v1924 = vmax.f32 %v1892, 0.0
        %v1925 = vmax.f32 %v1893, 0.0
        %v1926 = vmax.f32 %v1894, 0.0
        %1927 = vst [vmem:[%s207] sm:$0xff] %v1895
        %1928 = vst [vmem:[%s207 + $0x8] sm:$0xff] %v1896
        %1929 = vst [vmem:[%s207 + $0x10] sm:$0xff] %v1897
        %1930 = vst [vmem:[%s207 + $0x18] sm:$0xff] %v1898
        %1931 = vst [vmem:[%s207 + $0x20] sm:$0xff] %v1899
        %1932 = vst [vmem:[%s207 + $0x28] sm:$0xff] %v1900
        %1933 = vst [vmem:[%s207 + $0x30] sm:$0xff] %v1901
        %1934 = vst [vmem:[%s207 + $0x38] sm:$0xff] %v1902
        %1935 = vst [vmem:[%s207 + $0x40] sm:$0xff] %v1903
        %1936 = vst [vmem:[%s207 + $0x48] sm:$0xff] %v1904
        %1937 = vst [vmem:[%s207 + $0x50] sm:$0xff] %v1905
        %1938 = vst [vmem:[%s207 + $0x58] sm:$0xff] %v1906
        %1939 = vst [vmem:[%s207 + $0x60] sm:$0xff] %v1907
        %1940 = vst [vmem:[%s207 + $0x68] sm:$0xff] %v1908
        %1941 = vst [vmem:[%s207 + $0x70] sm:$0xff] %v1909
        %1942 = vst [vmem:[%s207 + $0x78] sm:$0xff] %v1910
        %1943 = vst [vmem:[%s207 + $0x80] sm:$0xff] %v1911
        %1944 = vst [vmem:[%s207 + $0x88] sm:$0xff] %v1912
        %1945 = vst [vmem:[%s207 + $0x90] sm:$0xff] %v1913
        %1946 = vst [vmem:[%s207 + $0x98] sm:$0xff] %v1914
        %1947 = vst [vmem:[%s207 + $0xa0] sm:$0xff] %v1915
        %1948 = vst [vmem:[%s207 + $0xa8] sm:$0xff] %v1916
        %1949 = vst [vmem:[%s207 + $0xb0] sm:$0xff] %v1917
        %1950 = vst [vmem:[%s207 + $0xb8] sm:$0xff] %v1918
        %1951 = vst [vmem:[%s207 + $0xc0] sm:$0xff] %v1919
        %1952 = vst [vmem:[%s207 + $0xc8] sm:$0xff] %v1920
        %1953 = vst [vmem:[%s207 + $0xd0] sm:$0xff] %v1921
        %1954 = vst [vmem:[%s207 + $0xd8] sm:$0xff] %v1922
        %1955 = vst [vmem:[%s207 + $0xe0] sm:$0xff] %v1923
        %1956 = vst [vmem:[%s207 + $0xe8] sm:$0xff] %v1924
        %1957 = vst [vmem:[%s207 + $0xf0] sm:$0xff] %v1925
        %1958 = vst [vmem:[%s207 + $0xf8] sm:$0xff] %v1926
        %s1959 = sand.u32 %s97, 1
        %s1960 = scalar_lea.sflag [#allocation4], %s1959
        %s1961 = sand.u32 %s97, 1
        %s1962 = smul.addr %s1961, 256
        %s1963 = scalar_lea.vmem [#allocation7], %s1962
        // Predicated region
        $region41: #{tpu_custom_call.1} parent=31 // pred_check
          %p1964 = pneg %p107
        $region42: #{tpu_custom_call.1} parent=31 // pred_check_branch
          %1966 = sbr.rel (%p1964) target = $region44
        $region43: #{tpu_custom_call.1} parent=31 // pred_region
          %1968 = vsyncadd %s1960, 0
          %s1969 = smul.addr %s21, 32
          %s1970 = smul.addr %s1969, 8
          %s1971 = scalar_lea.hbm %s3, %s1970
          %s1972 = sshll.u32 %s1963, 4
          %s1973 = int_to_ptr.vmem [resolvable:$true] %s1972
          %s1974 = sshll.u32 %s1971, 4
          %s1975 = int_to_ptr.hbm [resolvable:$true] %s1974
          %1980 = dma.vmem_to_hbm [thread:$0]  %s1973, 4096, %s1975, %s1960, 128, 128, 8
        $region44: #{tpu_custom_call.1} parent=31 // pred_fallthru
          _
      $region32: #{tpu_custom_call.1} parent=5 // pred_fallthru
        _
      %p1981 = scmp.le.s32.totalorder 2, %s16
      // Predicated region
      $region45: #{tpu_custom_call.1} parent=5 // pred_check
        %p1982 = pneg %p1981
      $region46: #{tpu_custom_call.1} parent=5 // pred_check_branch
        %1984 = sbr.rel (%p1982) target = $region48
      $region47: #{tpu_custom_call.1} parent=5 // pred_region
        %s1985 = ssub.s32 %s16, 2
        // Predicated region
        $region49: #{tpu_custom_call.1} parent=47 // pred_check
          %p1986 = pneg %p113
        $region50: #{tpu_custom_call.1} parent=47 // pred_check_branch
          %1988 = sbr.rel (%p1986) target = $region52
        $region51: #{tpu_custom_call.1} parent=47 // pred_region
          %s1989 = sand.u32 %s98, 1
          %s1990 = scalar_lea.sflag [#allocation4], %s1989
          %s1991 = sand.u32 %s98, 1
          %s1992 = smul.addr %s1991, 256
          %s1993 = scalar_lea.vmem [#allocation7], %s1992
          %1995 = dma.done %s1990, 4096
        $region52: #{tpu_custom_call.1} parent=47 // pred_fallthru
          _
      $region48: #{tpu_custom_call.1} parent=5 // pred_fallthru
        _
    $region6: #{tpu_custom_call.1} parent=1 // loop_footer
      %s20 = sadd.s32 1, %s16
    $region7: #{tpu_custom_call.1} parent=1 // loop_footer_branch
      %15 = sbr.rel target = $region3
    $region8: #{tpu_custom_call.1} parent=1 // loop_exit
      _
    %1996 = vsyncpa [#allocation3], 1
    %s1997 = scalar_lea.sflag [#allocation3], 1
    %1998 = vsyncpa %s1997, 1
    %1999 = vsyncpa [#allocation6], 1
    %2000 = vsyncpa [#allocation4], 1
    %s2001 = scalar_lea.sflag [#allocation4], 1
    %2002 = vsyncpa %s2001, 1

</llo_original>
